<compile_context>
chip_gen: v6e
topology: v6e:2x2x1
jax: 0.10.0
libtpu: 0.0.40
codegen_flags: <defaults>
</compile_context>

<pallas_src>
import numpy as np
import jax
import jax.numpy as jnp
from jax.experimental import pallas as pl
from jax.experimental.pallas import tpu as pltpu

EPS = 1e-5


def _vmem():
    return pl.BlockSpec(memory_space=pltpu.MemorySpace.VMEM)


# ------------------------------ fused kernel ---------------------------------

def fused_block_kernel(x_ref, wc_ref, sel1_ref, w2_ref, sel2_ref,
                       pc_ref, pf_ref, g0_ref, b0_ref, g2_ref, b2_ref,
                       blanes_ref, o_ref):
    """Whole StackedPreResnetBlock forward on VMEM-resident data.

    x_ref    : (N*H, W*Cin)        activation slab, lane = w*Cin + c
    wc_ref   : (3, W*Cin, 2*Wo*Cf) per-kh conv1 column map; last Wo*Cf lanes hold
                                   the folded 1x1 stride-2 shortcut (kh==0 only)
    sel1_ref : (3, N*Ho, N*H)      0/1 row selector (stride-2 rows, bottom pad)
    w2_ref   : (3, Wo*Cf, Wo*Cf)   per-kh conv2 column map (stride 1, pad 1)
    sel2_ref : (3, N*Ho, N*Ho)     0/1 row selector (pad-1 rows)
    pc_ref   : (W*Cin, Cin)        lane -> input-channel pooling (BN0 stats)
    pf_ref   : (Wo*Cf, Cf)         lane -> filter pooling (BN1 stats)
    blanes   : (3, Wo*Cf)          lane-expanded bias1 / bias3 / bias2
    o_ref    : (N*Ho, Wo*Cf)       lane-dense output slab
    """
    f32 = jnp.float32
    cin = pc_ref.shape[1]
    cf = pf_ref.shape[1]
    rows0, lanes0 = x_ref.shape
    rows1, lanes1 = o_ref.shape
    k1 = wc_ref.shape[0]
    k2 = w2_ref.shape[0]

    # ---- stage 1: BatchNorm(x) + ReLU (single-pass stats, pooling on the MXU) ----
    x = x_ref[...]
    inv_n0 = 1.0 / float(rows0 * (lanes0 // cin))
    s_c = jnp.sum(jnp.dot(x, pc_ref[...], preferred_element_type=f32),
                  axis=0, keepdims=True)                       # (1, Cin)
    q_c = jnp.sum(jnp.dot(x * x, pc_ref[...], preferred_element_type=f32),
                  axis=0, keepdims=True)
    mean0 = s_c * inv_n0
    var0 = q_c * inv_n0 - mean0 * mean0
    scale0 = g0_ref[...] * jax.lax.rsqrt(var0 + EPS)
    shift0 = b0_ref[...] - mean0 * scale0
    scale0_l = jnp.concatenate([scale0] * (lanes0 // cin), axis=1)   # (1, W*Cin)
    shift0_l = jnp.concatenate([shift0] * (lanes0 // cin), axis=1)
    y = jnp.maximum(x * scale0_l + shift0_l, 0.0)               # (N*H, W*Cin)

    blanes = blanes_ref[...]

    # ---- stage 2: conv1 (3x3, s2, pad (0,1)) with the 1x1 s2 shortcut fused ----
    acc = None
    for kh in range(k1):
        t = jnp.dot(y, wc_ref[kh], preferred_element_type=f32)           # (N*H, 2*Wo*Cf)
        u = jnp.dot(sel1_ref[kh], t, preferred_element_type=f32)         # (N*Ho, 2*Wo*Cf)
        acc = u if acc is None else acc + u
    r1 = acc[:, :lanes1] + blanes[0:1, :]        # conv1 + bias1
    sc = acc[:, lanes1:] + blanes[1:2, :]        # shortcut conv + bias3

    # ---- stage 3: BatchNorm(r1) + ReLU ----
    inv_n1 = 1.0 / float(rows1 * (lanes1 // cf))
    s_f = jnp.sum(jnp.dot(r1, pf_ref[...], preferred_element_type=f32),
                  axis=0, keepdims=True)                       # (1, Cf)
    q_f = jnp.sum(jnp.dot(r1 * r1, pf_ref[...], preferred_element_type=f32),
                  axis=0, keepdims=True)
    mean1 = s_f * inv_n1
    var1 = q_f * inv_n1 - mean1 * mean1
    scale1 = g2_ref[...] * jax.lax.rsqrt(var1 + EPS)
    shift1 = b2_ref[...] - mean1 * scale1
    scale1_l = jnp.concatenate([scale1] * (lanes1 // cf), axis=1)    # (1, Wo*Cf)
    shift1_l = jnp.concatenate([shift1] * (lanes1 // cf), axis=1)
    r1a = jnp.maximum(r1 * scale1_l + shift1_l, 0.0)

    # ---- stage 4: conv2 (3x3, s1, pad (1,1)) + bias2 + residual add ----
    acc2 = None
    for kh in range(k2):
        t = jnp.dot(r1a, w2_ref[kh], preferred_element_type=f32)         # (N*Ho, Wo*Cf)
        u = jnp.dot(sel2_ref[kh], t, preferred_element_type=f32)
        acc2 = u if acc2 is None else acc2 + u
    o_ref[...] = acc2 + blanes[2:3, :] + sc


# ------------------------- one-time parameter packing ------------------------

def pack_params(p, n, h, cin, cf):
    """Repack module params into the MXU-friendly structured matrices (run once)."""
    k = 3
    ho = h // 2

    # conv1 lane map: (w, c) -> (ow, f) per kh; stride 2, SAME pad (0,1) along W.
    a1 = np.zeros((k, h, ho), np.float32)
    for kw in range(k):
        for ow in range(ho):
            w = 2 * ow + kw
            if w < h:
                a1[kw, w, ow] = 1.0
    w1row = jnp.einsum("kwo,hkcf->hwcof", a1, p["w1"]).reshape(k, h * cin, ho * cf)
    # 1x1 stride-2 shortcut folded into the kh==0 tap as extra output lanes.
    wsrow = jnp.einsum("wo,cf->wcof", a1[0], p["w3"][0, 0]).reshape(h * cin, ho * cf)
    sc_stack = jnp.concatenate(
        [wsrow[None], jnp.zeros((k - 1, h * cin, ho * cf), jnp.float32)], axis=0)
    wc = jnp.concatenate([w1row, sc_stack], axis=2)              # (3, h*cin, 2*ho*cf)

    # conv2 lane map: (ow_in, c) -> (ow_out, f) per kh; stride 1, SAME pad (1,1).
    a2 = np.zeros((k, ho, ho), np.float32)
    for kw in range(k):
        for owo in range(ho):
            owi = owo + kw - 1
            if 0 <= owi < ho:
                a2[kw, owi, owo] = 1.0
    w2row = jnp.einsum("kio,hkcf->hicof", a2, p["w2"]).reshape(k, ho * cf, ho * cf)

    # Row selectors: conv1/shortcut (stride-2 rows, bottom pad) and conv2 (pad 1).
    sel1 = np.zeros((k, n * ho, n * h), np.float32)
    sel2 = np.zeros((k, n * ho, n * ho), np.float32)
    for kh in range(k):
        for b in range(n):
            for oh in range(ho):
                ih = 2 * oh + kh
                if ih < h:
                    sel1[kh, b * ho + oh, b * h + ih] = 1.0
                ih2 = oh + kh - 1
                if 0 <= ih2 < ho:
                    sel2[kh, b * ho + oh, b * ho + ih2] = 1.0

    # Lane -> channel pooling matrices for BatchNorm statistics.
    pc = np.tile(np.eye(cin, dtype=np.float32), (h, 1))          # (h*cin, cin)
    pf = np.tile(np.eye(cf, dtype=np.float32), (ho, 1))          # (ho*cf, cf)

    blanes = jnp.stack([jnp.tile(p["bias1"].reshape(-1), ho),
                        jnp.tile(p["bias3"].reshape(-1), ho),
                        jnp.tile(p["bias2"].reshape(-1), ho)], axis=0)   # (3, ho*cf)

    return dict(Wc=wc, Sel1=jnp.asarray(sel1), W2=w2row, Sel2=jnp.asarray(sel2),
                Pc=jnp.asarray(pc), Pf=jnp.asarray(pf),
                g0=p["g0"], b0=p["b0"], g2=p["g2"], b2=p["b2"], Blanes=blanes)


# ------------------------------- forward pass --------------------------------

def stacked_preresnet_block(x_nchw, packed):
    n, cin, h, w = x_nchw.shape
    ho = h // 2
    cf = packed["g2"].shape[-1]

    # NCHW -> lane-dense (N*H, W*Cin) slab.  (Layout plumbing kept outside the kernel.)
    x2d = jnp.transpose(x_nchw, (0, 2, 3, 1)).reshape(n * h, w * cin)

    out2d = pl.pallas_call(
        fused_block_kernel,
        out_shape=jax.ShapeDtypeStruct((n * ho, ho * cf), jnp.float32),
        in_specs=[_vmem()] * 12,
        out_specs=_vmem(),
    )(x2d, packed["Wc"], packed["Sel1"], packed["W2"], packed["Sel2"],
      packed["Pc"], packed["Pf"], packed["g0"], packed["b0"],
      packed["g2"], packed["b2"], packed["Blanes"])

    return jnp.transpose(out2d.reshape(n, ho, ho, cf), (0, 3, 1, 2))    # NCHW


# ---------------------------- params & reference -----------------------------

def init_params(key, cin, cf):
    ks = jax.random.split(key, 10)
    return {
        "g0": 1.0 + 0.1 * jax.random.normal(ks[0], (1, cin), jnp.float32),
        "b0": 0.1 * jax.random.normal(ks[1], (1, cin), jnp.float32),
        "w1": 0.1 * jax.random.normal(ks[2], (3, 3, cin, cf), jnp.float32),   # HWIO
        "bias1": 0.1 * jax.random.normal(ks[3], (1, cf), jnp.float32),
        "g2": 1.0 + 0.1 * jax.random.normal(ks[4], (1, cf), jnp.float32),
        "b2": 0.1 * jax.random.normal(ks[5], (1, cf), jnp.float32),
        "w2": 0.1 * jax.random.normal(ks[6], (3, 3, cf, cf), jnp.float32),    # HWIO
        "bias2": 0.1 * jax.random.normal(ks[7], (1, cf), jnp.float32),
        "w3": 0.1 * jax.random.normal(ks[8], (1, 1, cin, cf), jnp.float32),   # HWIO
        "bias3": 0.1 * jax.random.normal(ks[9], (1, cf), jnp.float32),
    }


def reference(x_nchw, p):
    # Pure-JAX NCHW reference mirroring the PyTorch forward.
    def bn(x, g, b):
        mu = jnp.mean(x, axis=(0, 2, 3), keepdims=True)
        var = jnp.mean(jnp.square(x - mu), axis=(0, 2, 3), keepdims=True)
        return ((x - mu) * jax.lax.rsqrt(var + EPS) * g.reshape(1, -1, 1, 1)
                + b.reshape(1, -1, 1, 1))

    def conv(x, w_hwio, b, stride, pad):
        w = jnp.transpose(w_hwio, (3, 2, 0, 1))  # OIHW
        y = jax.lax.conv_general_dilated(
            x, w, (stride, stride), padding=pad,
            dimension_numbers=("NCHW", "OIHW", "NCHW"),
            precision=jax.lax.Precision.HIGHEST)
        return y + b.reshape(1, -1, 1, 1)

    y = jnp.maximum(bn(x_nchw, p["g0"], p["b0"]), 0.0)
    r = conv(y, p["w1"], p["bias1"], 2, ((0, 1), (0, 1)))   # res1
    r = jnp.maximum(bn(r, p["g2"], p["b2"]), 0.0)           # res2 norm+act
    r = conv(r, p["w2"], p["bias2"], 1, ((1, 1), (1, 1)))   # res2 conv
    s = conv(y, p["w3"], p["bias3"], 2, ((0, 0), (0, 0)))   # res3 shortcut
    return s + r


if __name__ == "__main__":
    N, CIN, H, CF = 2, 4, 16, 16
    key = jax.random.PRNGKey(0)
    kx, kp = jax.random.split(key)
    x = jax.random.normal(kx, (N, CIN, H, H), jnp.float32)
    params = init_params(kp, CIN, CF)

    packed = pack_params(params, N, H, CIN, CF)   # one-time repack, off the hot path
    fwd = jax.jit(stacked_preresnet_block)

    out = jax.block_until_ready(fwd(x, packed))
    assert out.shape == (N, CF, H // 2, H // 2)

    ref = jax.block_until_ready(reference(x, params))
    diff = float(np.max(np.abs(np.asarray(out) - np.asarray(ref))))
    if diff > 0.1:
        raise AssertionError(f"mismatch vs reference, max abs diff = {diff}")
    print("KERNEL_OK")
</pallas_src>

<mosaic_0001>
module attributes {stable_mosaic.version = 11 : i64} {
  func.func @fused_block_kernel(%arg0: memref<32x64xf32, #tpu.memory_space<vmem>>, %arg1: memref<3x64x256xf32, #tpu.memory_space<vmem>>, %arg2: memref<3x16x32xf32, #tpu.memory_space<vmem>>, %arg3: memref<3x128x128xf32, #tpu.memory_space<vmem>>, %arg4: memref<3x16x16xf32, #tpu.memory_space<vmem>>, %arg5: memref<64x4xf32, #tpu.memory_space<vmem>>, %arg6: memref<128x16xf32, #tpu.memory_space<vmem>>, %arg7: memref<1x4xf32, #tpu.memory_space<vmem>>, %arg8: memref<1x4xf32, #tpu.memory_space<vmem>>, %arg9: memref<1x16xf32, #tpu.memory_space<vmem>>, %arg10: memref<1x16xf32, #tpu.memory_space<vmem>>, %arg11: memref<3x128xf32, #tpu.memory_space<vmem>>, %arg12: memref<16x128xf32, #tpu.memory_space<vmem>>) attributes {dimension_semantics = [], scalar_prefetch = 0 : i64, scratch_operands = 0 : i64, tpu.core_type = #tpu.core_type<tc>} {
    %c0 = arith.constant 0 : index
    %c0_0 = arith.constant 0 : index
    %0 = vector.load %arg0[%c0, %c0_0] : memref<32x64xf32, #tpu.memory_space<vmem>>, vector<32x64xf32>
    %c0_1 = arith.constant 0 : index
    %c0_2 = arith.constant 0 : index
    %1 = vector.load %arg5[%c0_1, %c0_2] : memref<64x4xf32, #tpu.memory_space<vmem>>, vector<64x4xf32>
    %cst = arith.constant dense<0.000000e+00> : vector<32x4xf32>
    %2 = tpu.matmul %0, %1, %cst {dimension_numbers = #tpu.dot_dimension_numbers<[1], [0], [0], [1], [0, 0, 1, 1], [], []>} : vector<32x64xf32>, vector<64x4xf32>, vector<32x4xf32> -> vector<32x4xf32>
    %cst_3 = arith.constant dense<0.000000e+00> : vector<4xf32>
    %3 = vector.multi_reduction <add>, %2, %cst_3 [0] : vector<32x4xf32> to vector<4xf32>
    %4 = vector.shape_cast %3 : vector<4xf32> to vector<1x4xf32>
    %5 = arith.mulf %0, %0 : vector<32x64xf32>
    %c0_4 = arith.constant 0 : index
    %c0_5 = arith.constant 0 : index
    %6 = vector.load %arg5[%c0_4, %c0_5] : memref<64x4xf32, #tpu.memory_space<vmem>>, vector<64x4xf32>
    %cst_6 = arith.constant dense<0.000000e+00> : vector<32x4xf32>
    %7 = tpu.matmul %5, %6, %cst_6 {dimension_numbers = #tpu.dot_dimension_numbers<[1], [0], [0], [1], [0, 0, 1, 1], [], []>} : vector<32x64xf32>, vector<64x4xf32>, vector<32x4xf32> -> vector<32x4xf32>
    %cst_7 = arith.constant dense<0.000000e+00> : vector<4xf32>
    %8 = vector.multi_reduction <add>, %7, %cst_7 [0] : vector<32x4xf32> to vector<4xf32>
    %9 = vector.shape_cast %8 : vector<4xf32> to vector<1x4xf32>
    %cst_8 = arith.constant 0.001953125 : f32
    %10 = vector.broadcast %cst_8 : f32 to vector<1x4xf32>
    %11 = arith.mulf %4, %10 : vector<1x4xf32>
    %cst_9 = arith.constant 0.001953125 : f32
    %12 = vector.broadcast %cst_9 : f32 to vector<1x4xf32>
    %13 = arith.mulf %9, %12 : vector<1x4xf32>
    %14 = arith.mulf %11, %11 : vector<1x4xf32>
    %15 = arith.subf %13, %14 : vector<1x4xf32>
    %c0_10 = arith.constant 0 : index
    %c0_11 = arith.constant 0 : index
    %16 = vector.load %arg7[%c0_10, %c0_11] : memref<1x4xf32, #tpu.memory_space<vmem>>, vector<1x4xf32>
    %cst_12 = arith.constant 9.99999974E-6 : f32
    %17 = vector.broadcast %cst_12 : f32 to vector<1x4xf32>
    %18 = arith.addf %15, %17 : vector<1x4xf32>
    %19 = math.rsqrt %18 : vector<1x4xf32>
    %20 = arith.mulf %16, %19 : vector<1x4xf32>
    %c0_13 = arith.constant 0 : index
    %c0_14 = arith.constant 0 : index
    %21 = vector.load %arg8[%c0_13, %c0_14] : memref<1x4xf32, #tpu.memory_space<vmem>>, vector<1x4xf32>
    %22 = arith.mulf %11, %20 : vector<1x4xf32>
    %23 = arith.subf %21, %22 : vector<1x4xf32>
    %24 = tpu.concatenate %20, %20, %20, %20, %20, %20, %20, %20, %20, %20, %20, %20, %20, %20, %20, %20 in 1 : vector<1x4xf32>, vector<1x4xf32>, vector<1x4xf32>, vector<1x4xf32>, vector<1x4xf32>, vector<1x4xf32>, vector<1x4xf32>, vector<1x4xf32>, vector<1x4xf32>, vector<1x4xf32>, vector<1x4xf32>, vector<1x4xf32>, vector<1x4xf32>, vector<1x4xf32>, vector<1x4xf32>, vector<1x4xf32> -> vector<1x64xf32>
    %25 = tpu.concatenate %23, %23, %23, %23, %23, %23, %23, %23, %23, %23, %23, %23, %23, %23, %23, %23 in 1 : vector<1x4xf32>, vector<1x4xf32>, vector<1x4xf32>, vector<1x4xf32>, vector<1x4xf32>, vector<1x4xf32>, vector<1x4xf32>, vector<1x4xf32>, vector<1x4xf32>, vector<1x4xf32>, vector<1x4xf32>, vector<1x4xf32>, vector<1x4xf32>, vector<1x4xf32>, vector<1x4xf32>, vector<1x4xf32> -> vector<1x64xf32>
    %26 = vector.broadcast %24 : vector<1x64xf32> to vector<32x64xf32>
    %27 = arith.mulf %0, %26 : vector<32x64xf32>
    %28 = vector.broadcast %25 : vector<1x64xf32> to vector<32x64xf32>
    %29 = arith.addf %27, %28 : vector<32x64xf32>
    %cst_15 = arith.constant 0.000000e+00 : f32
    %30 = vector.broadcast %cst_15 : f32 to vector<32x64xf32>
    %31 = arith.maximumf %29, %30 : vector<32x64xf32>
    %c0_16 = arith.constant 0 : index
    %c0_17 = arith.constant 0 : index
    %32 = vector.load %arg11[%c0_16, %c0_17] : memref<3x128xf32, #tpu.memory_space<vmem>>, vector<3x128xf32>
    %c0_18 = arith.constant 0 : index
    %c0_19 = arith.constant 0 : index
    %c0_20 = arith.constant 0 : index
    %33 = vector.load %arg1[%c0_18, %c0_19, %c0_20] : memref<3x64x256xf32, #tpu.memory_space<vmem>>, vector<1x64x256xf32>
    %34 = vector.shape_cast %33 : vector<1x64x256xf32> to vector<64x256xf32>
    %cst_21 = arith.constant dense<0.000000e+00> : vector<32x256xf32>
    %35 = tpu.matmul %31, %34, %cst_21 {dimension_numbers = #tpu.dot_dimension_numbers<[1], [0], [0], [1], [0, 0, 1, 1], [], []>} : vector<32x64xf32>, vector<64x256xf32>, vector<32x256xf32> -> vector<32x256xf32>
    %c0_22 = arith.constant 0 : index
    %c0_23 = arith.constant 0 : index
    %c0_24 = arith.constant 0 : index
    %36 = vector.load %arg2[%c0_22, %c0_23, %c0_24] : memref<3x16x32xf32, #tpu.memory_space<vmem>>, vector<1x16x32xf32>
    %37 = vector.shape_cast %36 : vector<1x16x32xf32> to vector<16x32xf32>
    %cst_25 = arith.constant dense<0.000000e+00> : vector<16x256xf32>
    %38 = tpu.matmul %37, %35, %cst_25 {dimension_numbers = #tpu.dot_dimension_numbers<[1], [0], [0], [1], [0, 0, 1, 1], [], []>} : vector<16x32xf32>, vector<32x256xf32>, vector<16x256xf32> -> vector<16x256xf32>
    %c1 = arith.constant 1 : index
    %c0_26 = arith.constant 0 : index
    %c0_27 = arith.constant 0 : index
    %39 = vector.load %arg1[%c1, %c0_26, %c0_27] : memref<3x64x256xf32, #tpu.memory_space<vmem>>, vector<1x64x256xf32>
    %40 = vector.shape_cast %39 : vector<1x64x256xf32> to vector<64x256xf32>
    %cst_28 = arith.constant dense<0.000000e+00> : vector<32x256xf32>
    %41 = tpu.matmul %31, %40, %cst_28 {dimension_numbers = #tpu.dot_dimension_numbers<[1], [0], [0], [1], [0, 0, 1, 1], [], []>} : vector<32x64xf32>, vector<64x256xf32>, vector<32x256xf32> -> vector<32x256xf32>
    %c1_29 = arith.constant 1 : index
    %c0_30 = arith.constant 0 : index
    %c0_31 = arith.constant 0 : index
    %42 = vector.load %arg2[%c1_29, %c0_30, %c0_31] : memref<3x16x32xf32, #tpu.memory_space<vmem>>, vector<1x16x32xf32>
    %43 = vector.shape_cast %42 : vector<1x16x32xf32> to vector<16x32xf32>
    %cst_32 = arith.constant dense<0.000000e+00> : vector<16x256xf32>
    %44 = tpu.matmul %43, %41, %cst_32 {dimension_numbers = #tpu.dot_dimension_numbers<[1], [0], [0], [1], [0, 0, 1, 1], [], []>} : vector<16x32xf32>, vector<32x256xf32>, vector<16x256xf32> -> vector<16x256xf32>
    %45 = arith.addf %38, %44 : vector<16x256xf32>
    %c2 = arith.constant 2 : index
    %c0_33 = arith.constant 0 : index
    %c0_34 = arith.constant 0 : index
    %46 = vector.load %arg1[%c2, %c0_33, %c0_34] : memref<3x64x256xf32, #tpu.memory_space<vmem>>, vector<1x64x256xf32>
    %47 = vector.shape_cast %46 : vector<1x64x256xf32> to vector<64x256xf32>
    %cst_35 = arith.constant dense<0.000000e+00> : vector<32x256xf32>
    %48 = tpu.matmul %31, %47, %cst_35 {dimension_numbers = #tpu.dot_dimension_numbers<[1], [0], [0], [1], [0, 0, 1, 1], [], []>} : vector<32x64xf32>, vector<64x256xf32>, vector<32x256xf32> -> vector<32x256xf32>
    %c2_36 = arith.constant 2 : index
    %c0_37 = arith.constant 0 : index
    %c0_38 = arith.constant 0 : index
    %49 = vector.load %arg2[%c2_36, %c0_37, %c0_38] : memref<3x16x32xf32, #tpu.memory_space<vmem>>, vector<1x16x32xf32>
    %50 = vector.shape_cast %49 : vector<1x16x32xf32> to vector<16x32xf32>
    %cst_39 = arith.constant dense<0.000000e+00> : vector<16x256xf32>
    %51 = tpu.matmul %50, %48, %cst_39 {dimension_numbers = #tpu.dot_dimension_numbers<[1], [0], [0], [1], [0, 0, 1, 1], [], []>} : vector<16x32xf32>, vector<32x256xf32>, vector<16x256xf32> -> vector<16x256xf32>
    %52 = arith.addf %45, %51 : vector<16x256xf32>
    %53 = vector.extract_strided_slice %52 {offsets = [0, 0], sizes = [16, 128], strides = [1, 1]} : vector<16x256xf32> to vector<16x128xf32>
    %54 = vector.extract_strided_slice %32 {offsets = [0, 0], sizes = [1, 128], strides = [1, 1]} : vector<3x128xf32> to vector<1x128xf32>
    %55 = vector.broadcast %54 : vector<1x128xf32> to vector<16x128xf32>
    %56 = arith.addf %53, %55 : vector<16x128xf32>
    %57 = vector.extract_strided_slice %52 {offsets = [0, 128], sizes = [16, 128], strides = [1, 1]} : vector<16x256xf32> to vector<16x128xf32>
    %58 = vector.extract_strided_slice %32 {offsets = [1, 0], sizes = [1, 128], strides = [1, 1]} : vector<3x128xf32> to vector<1x128xf32>
    %59 = vector.broadcast %58 : vector<1x128xf32> to vector<16x128xf32>
    %60 = arith.addf %57, %59 : vector<16x128xf32>
    %c0_40 = arith.constant 0 : index
    %c0_41 = arith.constant 0 : index
    %61 = vector.load %arg6[%c0_40, %c0_41] : memref<128x16xf32, #tpu.memory_space<vmem>>, vector<128x16xf32>
    %cst_42 = arith.constant dense<0.000000e+00> : vector<16x16xf32>
    %62 = tpu.matmul %56, %61, %cst_42 {dimension_numbers = #tpu.dot_dimension_numbers<[1], [0], [0], [1], [0, 0, 1, 1], [], []>} : vector<16x128xf32>, vector<128x16xf32>, vector<16x16xf32> -> vector<16x16xf32>
    %cst_43 = arith.constant dense<0.000000e+00> : vector<16xf32>
    %63 = vector.multi_reduction <add>, %62, %cst_43 [0] : vector<16x16xf32> to vector<16xf32>
    %64 = vector.shape_cast %63 : vector<16xf32> to vector<1x16xf32>
    %65 = arith.mulf %56, %56 : vector<16x128xf32>
    %c0_44 = arith.constant 0 : index
    %c0_45 = arith.constant 0 : index
    %66 = vector.load %arg6[%c0_44, %c0_45] : memref<128x16xf32, #tpu.memory_space<vmem>>, vector<128x16xf32>
    %cst_46 = arith.constant dense<0.000000e+00> : vector<16x16xf32>
    %67 = tpu.matmul %65, %66, %cst_46 {dimension_numbers = #tpu.dot_dimension_numbers<[1], [0], [0], [1], [0, 0, 1, 1], [], []>} : vector<16x128xf32>, vector<128x16xf32>, vector<16x16xf32> -> vector<16x16xf32>
    %cst_47 = arith.constant dense<0.000000e+00> : vector<16xf32>
    %68 = vector.multi_reduction <add>, %67, %cst_47 [0] : vector<16x16xf32> to vector<16xf32>
    %69 = vector.shape_cast %68 : vector<16xf32> to vector<1x16xf32>
    %cst_48 = arith.constant 7.812500e-03 : f32
    %70 = vector.broadcast %cst_48 : f32 to vector<1x16xf32>
    %71 = arith.mulf %64, %70 : vector<1x16xf32>
    %cst_49 = arith.constant 7.812500e-03 : f32
    %72 = vector.broadcast %cst_49 : f32 to vector<1x16xf32>
    %73 = arith.mulf %69, %72 : vector<1x16xf32>
    %74 = arith.mulf %71, %71 : vector<1x16xf32>
    %75 = arith.subf %73, %74 : vector<1x16xf32>
    %c0_50 = arith.constant 0 : index
    %c0_51 = arith.constant 0 : index
    %76 = vector.load %arg9[%c0_50, %c0_51] : memref<1x16xf32, #tpu.memory_space<vmem>>, vector<1x16xf32>
    %cst_52 = arith.constant 9.99999974E-6 : f32
    %77 = vector.broadcast %cst_52 : f32 to vector<1x16xf32>
    %78 = arith.addf %75, %77 : vector<1x16xf32>
    %79 = math.rsqrt %78 : vector<1x16xf32>
    %80 = arith.mulf %76, %79 : vector<1x16xf32>
    %c0_53 = arith.constant 0 : index
    %c0_54 = arith.constant 0 : index
    %81 = vector.load %arg10[%c0_53, %c0_54] : memref<1x16xf32, #tpu.memory_space<vmem>>, vector<1x16xf32>
    %82 = arith.mulf %71, %80 : vector<1x16xf32>
    %83 = arith.subf %81, %82 : vector<1x16xf32>
    %84 = tpu.concatenate %80, %80, %80, %80, %80, %80, %80, %80 in 1 : vector<1x16xf32>, vector<1x16xf32>, vector<1x16xf32>, vector<1x16xf32>, vector<1x16xf32>, vector<1x16xf32>, vector<1x16xf32>, vector<1x16xf32> -> vector<1x128xf32>
    %85 = tpu.concatenate %83, %83, %83, %83, %83, %83, %83, %83 in 1 : vector<1x16xf32>, vector<1x16xf32>, vector<1x16xf32>, vector<1x16xf32>, vector<1x16xf32>, vector<1x16xf32>, vector<1x16xf32>, vector<1x16xf32> -> vector<1x128xf32>
    %86 = vector.broadcast %84 : vector<1x128xf32> to vector<16x128xf32>
    %87 = arith.mulf %56, %86 : vector<16x128xf32>
    %88 = vector.broadcast %85 : vector<1x128xf32> to vector<16x128xf32>
    %89 = arith.addf %87, %88 : vector<16x128xf32>
    %cst_55 = arith.constant 0.000000e+00 : f32
    %90 = vector.broadcast %cst_55 : f32 to vector<16x128xf32>
    %91 = arith.maximumf %89, %90 : vector<16x128xf32>
    %c0_56 = arith.constant 0 : index
    %c0_57 = arith.constant 0 : index
    %c0_58 = arith.constant 0 : index
    %92 = vector.load %arg3[%c0_56, %c0_57, %c0_58] : memref<3x128x128xf32, #tpu.memory_space<vmem>>, vector<1x128x128xf32>
    %93 = vector.shape_cast %92 : vector<1x128x128xf32> to vector<128x128xf32>
    %cst_59 = arith.constant dense<0.000000e+00> : vector<16x128xf32>
    %94 = tpu.matmul %91, %93, %cst_59 {dimension_numbers = #tpu.dot_dimension_numbers<[1], [0], [0], [1], [0, 0, 1, 1], [], []>} : vector<16x128xf32>, vector<128x128xf32>, vector<16x128xf32> -> vector<16x128xf32>
    %c0_60 = arith.constant 0 : index
    %c0_61 = arith.constant 0 : index
    %c0_62 = arith.constant 0 : index
    %95 = vector.load %arg4[%c0_60, %c0_61, %c0_62] : memref<3x16x16xf32, #tpu.memory_space<vmem>>, vector<1x16x16xf32>
    %96 = vector.shape_cast %95 : vector<1x16x16xf32> to vector<16x16xf32>
    %cst_63 = arith.constant dense<0.000000e+00> : vector<16x128xf32>
    %97 = tpu.matmul %96, %94, %cst_63 {dimension_numbers = #tpu.dot_dimension_numbers<[1], [0], [0], [1], [0, 0, 1, 1], [], []>} : vector<16x16xf32>, vector<16x128xf32>, vector<16x128xf32> -> vector<16x128xf32>
    %c1_64 = arith.constant 1 : index
    %c0_65 = arith.constant 0 : index
    %c0_66 = arith.constant 0 : index
    %98 = vector.load %arg3[%c1_64, %c0_65, %c0_66] : memref<3x128x128xf32, #tpu.memory_space<vmem>>, vector<1x128x128xf32>
    %99 = vector.shape_cast %98 : vector<1x128x128xf32> to vector<128x128xf32>
    %cst_67 = arith.constant dense<0.000000e+00> : vector<16x128xf32>
    %100 = tpu.matmul %91, %99, %cst_67 {dimension_numbers = #tpu.dot_dimension_numbers<[1], [0], [0], [1], [0, 0, 1, 1], [], []>} : vector<16x128xf32>, vector<128x128xf32>, vector<16x128xf32> -> vector<16x128xf32>
    %c1_68 = arith.constant 1 : index
    %c0_69 = arith.constant 0 : index
    %c0_70 = arith.constant 0 : index
    %101 = vector.load %arg4[%c1_68, %c0_69, %c0_70] : memref<3x16x16xf32, #tpu.memory_space<vmem>>, vector<1x16x16xf32>
    %102 = vector.shape_cast %101 : vector<1x16x16xf32> to vector<16x16xf32>
    %cst_71 = arith.constant dense<0.000000e+00> : vector<16x128xf32>
    %103 = tpu.matmul %102, %100, %cst_71 {dimension_numbers = #tpu.dot_dimension_numbers<[1], [0], [0], [1], [0, 0, 1, 1], [], []>} : vector<16x16xf32>, vector<16x128xf32>, vector<16x128xf32> -> vector<16x128xf32>
    %104 = arith.addf %97, %103 : vector<16x128xf32>
    %c2_72 = arith.constant 2 : index
    %c0_73 = arith.constant 0 : index
    %c0_74 = arith.constant 0 : index
    %105 = vector.load %arg3[%c2_72, %c0_73, %c0_74] : memref<3x128x128xf32, #tpu.memory_space<vmem>>, vector<1x128x128xf32>
    %106 = vector.shape_cast %105 : vector<1x128x128xf32> to vector<128x128xf32>
    %cst_75 = arith.constant dense<0.000000e+00> : vector<16x128xf32>
    %107 = tpu.matmul %91, %106, %cst_75 {dimension_numbers = #tpu.dot_dimension_numbers<[1], [0], [0], [1], [0, 0, 1, 1], [], []>} : vector<16x128xf32>, vector<128x128xf32>, vector<16x128xf32> -> vector<16x128xf32>
    %c2_76 = arith.constant 2 : index
    %c0_77 = arith.constant 0 : index
    %c0_78 = arith.constant 0 : index
    %108 = vector.load %arg4[%c2_76, %c0_77, %c0_78] : memref<3x16x16xf32, #tpu.memory_space<vmem>>, vector<1x16x16xf32>
    %109 = vector.shape_cast %108 : vector<1x16x16xf32> to vector<16x16xf32>
    %cst_79 = arith.constant dense<0.000000e+00> : vector<16x128xf32>
    %110 = tpu.matmul %109, %107, %cst_79 {dimension_numbers = #tpu.dot_dimension_numbers<[1], [0], [0], [1], [0, 0, 1, 1], [], []>} : vector<16x16xf32>, vector<16x128xf32>, vector<16x128xf32> -> vector<16x128xf32>
    %111 = arith.addf %104, %110 : vector<16x128xf32>
    %112 = vector.extract_strided_slice %32 {offsets = [2, 0], sizes = [1, 128], strides = [1, 1]} : vector<3x128xf32> to vector<1x128xf32>
    %113 = vector.broadcast %112 : vector<1x128xf32> to vector<16x128xf32>
    %114 = arith.addf %111, %113 : vector<16x128xf32>
    %115 = arith.addf %114, %60 : vector<16x128xf32>
    %c0_80 = arith.constant 0 : index
    %c0_81 = arith.constant 0 : index
    %116 = vector.load %arg12[%c0_80, %c0_81] : memref<16x128xf32, #tpu.memory_space<vmem>>, vector<16x128xf32>
    tpu.vector_store %arg12[%c0_80, %c0_81], %115 {strides = array<i32>} : memref<16x128xf32, #tpu.memory_space<vmem>>, vector<16x128xf32>,
    return
  }
}

</mosaic_0001>

<llo_original>
// kernel: stacked_preresnet_block.1
$region0: #{stacked_preresnet_block.1}
  #allocation0 [shape = 'u32[]', space=smem, size = 0x4, offset = 0x4, fixed_abs, tag = 'smem constant byte address 0x4 - core index']
  #allocation1 [shape = 'u32[144,128]{1,0:T(1,128)}', space=vmem, size = 0x12000, scoped, tag = 'internal scratch']
  %s0 = inlined_call_operand.vmem [shape: f32[32,64], index: 0, kind: input, shape index: {}]
  %s1 = inlined_call_operand.vmem [shape: f32[3,64,256], index: 1, kind: input, shape index: {}]
  %s2 = inlined_call_operand.vmem [shape: f32[3,16,32], index: 2, kind: input, shape index: {}]
  %s3 = inlined_call_operand.hbm [shape: f32[3,128,128], index: 3, kind: input, shape index: {}]
  %s4 = inlined_call_operand.vmem [shape: f32[3,16,16], index: 4, kind: input, shape index: {}]
  %s5 = inlined_call_operand.vmem [shape: f32[64,4], index: 5, kind: input, shape index: {}]
  %s6 = inlined_call_operand.vmem [shape: f32[128,16], index: 6, kind: input, shape index: {}]
  %s7 = inlined_call_operand.vmem [shape: f32[1,4], index: 7, kind: input, shape index: {}]
  %s8 = inlined_call_operand.vmem [shape: f32[1,4], index: 8, kind: input, shape index: {}]
  %s9 = inlined_call_operand.vmem [shape: f32[1,16], index: 9, kind: input, shape index: {}]
  %s10 = inlined_call_operand.vmem [shape: f32[1,16], index: 10, kind: input, shape index: {}]
  %s11 = inlined_call_operand.vmem [shape: f32[3,128], index: 11, kind: input, shape index: {}]
  %s12 = inlined_call_operand.vmem [shape: f32[16,128], index: 12, kind: output, shape index: {}]
  %s13 = sld [smem:[#allocation0]]
  $region62: #{stacked_preresnet_block.1} parent=0
    _
  %s15 = ssub.s32 1, %s13
  %s16 = scalar_select 0, %s15, %s13
  $region1: #{stacked_preresnet_block.1} parent=0
    #allocation2 [shape = 'u8[196608]{0}', space=vmem, size = 0x30000, scoped, tag = 'input window, operand 3, single buffered']
    #allocation3 [shape = 's32[1]{0}', space=sflag, size = 0x4, scoped, tag = 'scoped memory for stacked_preresnet_block.1']
    %17 = vsyncpa [#allocation3], 0
    // Predicated region
    $region2: #{stacked_preresnet_block.1} parent=1 // pred_check
      _
    $region3: #{stacked_preresnet_block.1} parent=1 // pred_check_branch
      %19 = sbr.rel (0) target = $region5
    $region4: #{stacked_preresnet_block.1} parent=1 // pred_region
      _
    $region5: #{stacked_preresnet_block.1} parent=1 // pred_fallthru
      _
    // Predicated region
    $region6: #{stacked_preresnet_block.1} parent=1 // pred_check
      _
    $region7: #{stacked_preresnet_block.1} parent=1 // pred_check_branch
      %21 = sbr.rel (0) target = $region9
    $region8: #{stacked_preresnet_block.1} parent=1 // pred_region
      _
    $region9: #{stacked_preresnet_block.1} parent=1 // pred_fallthru
      _
    // Predicated region
    $region10: #{stacked_preresnet_block.1} parent=1 // pred_check
      _
    $region11: #{stacked_preresnet_block.1} parent=1 // pred_check_branch
      %23 = sbr.rel (0) target = $region13
    $region12: #{stacked_preresnet_block.1} parent=1 // pred_region
      _
    $region13: #{stacked_preresnet_block.1} parent=1 // pred_fallthru
      _
    // Predicated region
    $region14: #{stacked_preresnet_block.1} parent=1 // pred_check
      _
    $region15: #{stacked_preresnet_block.1} parent=1 // pred_check_branch
      %25 = sbr.rel (0) target = $region17
    $region16: #{stacked_preresnet_block.1} parent=1 // pred_region
      %s27 = ssub.s32 6144, 6144
      %28 = vsyncadd [#allocation3], %s27
      %s29 = sshll.u32 [#allocation2], 4
      %s30 = int_to_ptr.vmem [resolvable:$true] %s29
      %35 = dma.hbm_to_vmem [thread:$0]  %s3, 6144, %s30, [#allocation3], 128, 128, 8
    $region17: #{stacked_preresnet_block.1} parent=1 // pred_fallthru
      _
    // Predicated region
    $region18: #{stacked_preresnet_block.1} parent=1 // pred_check
      _
    $region19: #{stacked_preresnet_block.1} parent=1 // pred_check_branch
      %37 = sbr.rel (0) target = $region21
    $region20: #{stacked_preresnet_block.1} parent=1 // pred_region
      _
    $region21: #{stacked_preresnet_block.1} parent=1 // pred_fallthru
      _
    // Predicated region
    $region22: #{stacked_preresnet_block.1} parent=1 // pred_check
      _
    $region23: #{stacked_preresnet_block.1} parent=1 // pred_check_branch
      %39 = sbr.rel (0) target = $region25
    $region24: #{stacked_preresnet_block.1} parent=1 // pred_region
      _
    $region25: #{stacked_preresnet_block.1} parent=1 // pred_fallthru
      _
    // Predicated region
    $region26: #{stacked_preresnet_block.1} parent=1 // pred_check
      _
    $region27: #{stacked_preresnet_block.1} parent=1 // pred_check_branch
      %41 = sbr.rel (0) target = $region29
    $region28: #{stacked_preresnet_block.1} parent=1 // pred_region
      _
    $region29: #{stacked_preresnet_block.1} parent=1 // pred_fallthru
      _
    // Predicated region
    $region30: #{stacked_preresnet_block.1} parent=1 // pred_check
      _
    $region31: #{stacked_preresnet_block.1} parent=1 // pred_check_branch
      %43 = sbr.rel (0) target = $region33
    $region32: #{stacked_preresnet_block.1} parent=1 // pred_region
      _
    $region33: #{stacked_preresnet_block.1} parent=1 // pred_fallthru
      _
    // Predicated region
    $region34: #{stacked_preresnet_block.1} parent=1 // pred_check
      _
    $region35: #{stacked_preresnet_block.1} parent=1 // pred_check_branch
      %45 = sbr.rel (0) target = $region37
    $region36: #{stacked_preresnet_block.1} parent=1 // pred_region
      _
    $region37: #{stacked_preresnet_block.1} parent=1 // pred_fallthru
      _
    // Predicated region
    $region38: #{stacked_preresnet_block.1} parent=1 // pred_check
      _
    $region39: #{stacked_preresnet_block.1} parent=1 // pred_check_branch
      %47 = sbr.rel (0) target = $region41
    $region40: #{stacked_preresnet_block.1} parent=1 // pred_region
      _
    $region41: #{stacked_preresnet_block.1} parent=1 // pred_fallthru
      _
    // Predicated region
    $region42: #{stacked_preresnet_block.1} parent=1 // pred_check
      _
    $region43: #{stacked_preresnet_block.1} parent=1 // pred_check_branch
      %49 = sbr.rel (0) target = $region45
    $region44: #{stacked_preresnet_block.1} parent=1 // pred_region
      _
    $region45: #{stacked_preresnet_block.1} parent=1 // pred_fallthru
      _
    // Predicated region
    $region46: #{stacked_preresnet_block.1} parent=1 // pred_check
      _
    $region47: #{stacked_preresnet_block.1} parent=1 // pred_check_branch
      %51 = sbr.rel (0) target = $region49
    $region48: #{stacked_preresnet_block.1} parent=1 // pred_region
      _
    $region49: #{stacked_preresnet_block.1} parent=1 // pred_fallthru
      _
    // Predicated region
    $region50: #{stacked_preresnet_block.1} parent=1 // pred_check
      _
    $region51: #{stacked_preresnet_block.1} parent=1 // pred_check_branch
      %53 = sbr.rel (0) target = $region53
    $region52: #{stacked_preresnet_block.1} parent=1 // pred_region
      %54 = dma.done [#allocation3], 6144
    $region53: #{stacked_preresnet_block.1} parent=1 // pred_fallthru
      _
    %v55 = vld [vmem:[%s0] sm:$0xff]
    %v56 = vld [vmem:[%s0 + $0x8] sm:$0xff]
    %v57 = vld [vmem:[%s0 + $0x10] sm:$0xff]
    %v58 = vld [vmem:[%s0 + $0x18] sm:$0xff]
    %v59 = vld [vmem:[%s5] sm:$0xff]
    %v60 = vld [vmem:[%s5 + $0x8] sm:$0xff]
    %v61 = vld [vmem:[%s5 + $0x10] sm:$0xff]
    %v62 = vld [vmem:[%s5 + $0x18] sm:$0xff]
    %v63 = vld [vmem:[%s5 + $0x20] sm:$0xff]
    %v64 = vld [vmem:[%s5 + $0x28] sm:$0xff]
    %v65 = vld [vmem:[%s5 + $0x30] sm:$0xff]
    %v66 = vld [vmem:[%s5 + $0x38] sm:$0xff]
    %vm67 = vcmask 523264
    %v69 = vsel %vm67, %v55, 0
    %v72 = vsel %vm67, %v56, 0
    %v75 = vsel %vm67, %v57, 0
    %v78 = vsel %vm67, %v58, 0
    %80 = vmatprep.subr.mxu0 0.0
    %81 = vmatpush1.msra.mxu0 0.0
    %82 = vmatprep.subr.mxu0 0.0
    %83 = vmatpush1.msra.mxu0 0.0
    %84 = vmatprep.subr.mxu0 0.0
    %85 = vmatpush1.msra.mxu0 0.0
    %86 = vmatprep.subr.mxu0 0.0
    %87 = vmatpush1.msra.mxu0 0.0
    %88 = vmatprep.subr.mxu0 0.0
    %89 = vmatpush1.msra.mxu0 0.0
    %90 = vmatprep.subr.mxu0 0.0
    %91 = vmatpush1.msra.mxu0 0.0
    %92 = vmatprep.subr.mxu0 0.0
    %93 = vmatpush1.msra.mxu0 0.0
    %94 = vmatprep.subr.mxu0 0.0
    %95 = vmatpush1.msra.mxu0 0.0
    %96 = vmatprep.subr.mxu0 0.0
    %97 = vmatpush1.msra.mxu0 %v66
    %98 = vmatprep.subr.mxu0 0.0
    %99 = vmatpush1.msra.mxu0 %v65
    %100 = vmatprep.subr.mxu0 0.0
    %101 = vmatpush1.msra.mxu0 %v64
    %102 = vmatprep.subr.mxu0 0.0
    %103 = vmatpush1.msra.mxu0 %v63
    %104 = vmatprep.subr.mxu0 0.0
    %105 = vmatpush1.msra.mxu0 %v62
    %106 = vmatprep.subr.mxu0 0.0
    %107 = vmatpush1.msra.mxu0 %v61
    %108 = vmatprep.subr.mxu0 0.0
    %109 = vmatpush1.msra.mxu0 %v60
    %110 = vmatprep.subr.mxu0 0.0
    %111 = vmatpush1.msra.mxu0 %v59
    %112 = vmatprep.subr.mxu0 0.0
    %113 = vmatpush2.msra.mxu0 0.0
    %114 = vmatprep.subr.mxu0 0.0
    %115 = vmatpush2.msra.mxu0 0.0
    %116 = vmatprep.subr.mxu0 0.0
    %117 = vmatpush2.msra.mxu0 0.0
    %118 = vmatprep.subr.mxu0 0.0
    %119 = vmatpush2.msra.mxu0 0.0
    %120 = vmatprep.subr.mxu0 0.0
    %121 = vmatpush2.msra.mxu0 0.0
    %122 = vmatprep.subr.mxu0 0.0
    %123 = vmatpush2.msra.mxu0 0.0
    %124 = vmatprep.subr.mxu0 0.0
    %125 = vmatpush2.msra.mxu0 0.0
    %126 = vmatprep.subr.mxu0 0.0
    %127 = vmatpush2.msra.mxu0 0.0
    %128 = vmatprep.subr.mxu0 0.0
    %129 = vmatpush2.msra.mxu0 0.0
    %130 = vmatprep.subr.mxu0 0.0
    %131 = vmatpush2.msra.mxu0 0.0
    %132 = vmatprep.subr.mxu0 0.0
    %133 = vmatpush2.msra.mxu0 0.0
    %134 = vmatprep.subr.mxu0 0.0
    %135 = vmatpush2.msra.mxu0 0.0
    %136 = vmatprep.subr.mxu0 0.0
    %137 = vmatpush2.msra.mxu0 0.0
    %138 = vmatprep.subr.mxu0 0.0
    %139 = vmatpush2.msra.mxu0 0.0
    %140 = vmatprep.subr.mxu0 0.0
    %141 = vmatpush2.msra.mxu0 0.0
    %142 = vmatprep.subr.mxu0 0.0
    %143 = vmatpush2.msra.mxu0 0.0
    %144 = vmatprep.mubr.f32.mxu0 0.0
    %145 = vmatmul.mubr.f32.gmra.mxu0 %v69
    %v146 = vpop.f32.mrf.mxu0
    %v147 = vadd.f32 0.0, %v146
    %v148 = vpop.f32.mrf.mxu0
    %149 = vmatprep.mubr.f32.mxu0 0.0
    %150 = vmatmul.mubr.f32.gmra.mxu0 %v72
    %v151 = vpop.f32.mrf.mxu0
    %v152 = vadd.f32 0.0, %v151
    %v153 = vpop.f32.mrf.mxu0
    %154 = vmatprep.mubr.f32.mxu0 0.0
    %155 = vmatmul.mubr.f32.gmra.mxu0 %v75
    %v156 = vpop.f32.mrf.mxu0
    %v157 = vadd.f32 0.0, %v156
    %v158 = vpop.f32.mrf.mxu0
    %159 = vmatprep.mubr.f32.mxu0 0.0
    %160 = vmatmul.mubr.f32.gmra.mxu0 %v78
    %v161 = vpop.f32.mrf.mxu0
    %v162 = vadd.f32 0.0, %v161
    %v163 = vpop.f32.mrf.mxu0
    %164 = vdwg.mxu0
    %vm165 = vcmask 31744
    %v166 = vsel %vm165, %v147, 0.0
    %v167 = vsel %vm165, %v152, 0.0
    %v168 = vadd.f32 %v166, %v167
    %v169 = vsel %vm165, %v157, 0.0
    %v170 = vadd.f32 %v168, %v169
    %v171 = vsel %vm165, %v162, 0.0
    %v172 = vadd.f32 %v170, %v171
    %v173 = vrot.slane %v172, 4
    %v174 = vadd.f32 %v172, %v173
    %v175 = vrot.slane %v174, 2
    %v176 = vadd.f32 %v174, %v175
    %v177 = vrot.slane %v176, 1
    %v178 = vadd.f32 %v176, %v177
    %v179 = vmul.f32 %v55, %v55
    %v180 = vmul.f32 %v56, %v56
    %v181 = vmul.f32 %v57, %v57
    %v182 = vmul.f32 %v58, %v58
    %v184 = vsel %vm67, %v179, 0
    %v187 = vsel %vm67, %v180, 0
    %v190 = vsel %vm67, %v181, 0
    %v193 = vsel %vm67, %v182, 0
    %195 = vmatprep.subr.mxu0 0.0
    %196 = vmatpush1.msra.mxu0 0.0
    %197 = vmatprep.subr.mxu0 0.0
    %198 = vmatpush1.msra.mxu0 0.0
    %199 = vmatprep.subr.mxu0 0.0
    %200 = vmatpush1.msra.mxu0 0.0
    %201 = vmatprep.subr.mxu0 0.0
    %202 = vmatpush1.msra.mxu0 0.0
    %203 = vmatprep.subr.mxu0 0.0
    %204 = vmatpush1.msra.mxu0 0.0
    %205 = vmatprep.subr.mxu0 0.0
    %206 = vmatpush1.msra.mxu0 0.0
    %207 = vmatprep.subr.mxu0 0.0
    %208 = vmatpush1.msra.mxu0 0.0
    %209 = vmatprep.subr.mxu0 0.0
    %210 = vmatpush1.msra.mxu0 0.0
    %211 = vmatprep.subr.mxu0 0.0
    %212 = vmatpush1.msra.mxu0 %v66
    %213 = vmatprep.subr.mxu0 0.0
    %214 = vmatpush1.msra.mxu0 %v65
    %215 = vmatprep.subr.mxu0 0.0
    %216 = vmatpush1.msra.mxu0 %v64
    %217 = vmatprep.subr.mxu0 0.0
    %218 = vmatpush1.msra.mxu0 %v63
    %219 = vmatprep.subr.mxu0 0.0
    %220 = vmatpush1.msra.mxu0 %v62
    %221 = vmatprep.subr.mxu0 0.0
    %222 = vmatpush1.msra.mxu0 %v61
    %223 = vmatprep.subr.mxu0 0.0
    %224 = vmatpush1.msra.mxu0 %v60
    %225 = vmatprep.subr.mxu0 0.0
    %226 = vmatpush1.msra.mxu0 %v59
    %227 = vmatprep.subr.mxu0 0.0
    %228 = vmatpush2.msra.mxu0 0.0
    %229 = vmatprep.subr.mxu0 0.0
    %230 = vmatpush2.msra.mxu0 0.0
    %231 = vmatprep.subr.mxu0 0.0
    %232 = vmatpush2.msra.mxu0 0.0
    %233 = vmatprep.subr.mxu0 0.0
    %234 = vmatpush2.msra.mxu0 0.0
    %235 = vmatprep.subr.mxu0 0.0
    %236 = vmatpush2.msra.mxu0 0.0
    %237 = vmatprep.subr.mxu0 0.0
    %238 = vmatpush2.msra.mxu0 0.0
    %239 = vmatprep.subr.mxu0 0.0
    %240 = vmatpush2.msra.mxu0 0.0
    %241 = vmatprep.subr.mxu0 0.0
    %242 = vmatpush2.msra.mxu0 0.0
    %243 = vmatprep.subr.mxu0 0.0
    %244 = vmatpush2.msra.mxu0 0.0
    %245 = vmatprep.subr.mxu0 0.0
    %246 = vmatpush2.msra.mxu0 0.0
    %247 = vmatprep.subr.mxu0 0.0
    %248 = vmatpush2.msra.mxu0 0.0
    %249 = vmatprep.subr.mxu0 0.0
    %250 = vmatpush2.msra.mxu0 0.0
    %251 = vmatprep.subr.mxu0 0.0
    %252 = vmatpush2.msra.mxu0 0.0
    %253 = vmatprep.subr.mxu0 0.0
    %254 = vmatpush2.msra.mxu0 0.0
    %255 = vmatprep.subr.mxu0 0.0
    %256 = vmatpush2.msra.mxu0 0.0
    %257 = vmatprep.subr.mxu0 0.0
    %258 = vmatpush2.msra.mxu0 0.0
    %259 = vmatprep.mubr.f32.mxu0 0.0
    %260 = vmatmul.mubr.f32.gmra.mxu0 %v184
    %v261 = vpop.f32.mrf.mxu0
    %v262 = vadd.f32 0.0, %v261
    %v263 = vpop.f32.mrf.mxu0
    %264 = vmatprep.mubr.f32.mxu0 0.0
    %265 = vmatmul.mubr.f32.gmra.mxu0 %v187
    %v266 = vpop.f32.mrf.mxu0
    %v267 = vadd.f32 0.0, %v266
    %v268 = vpop.f32.mrf.mxu0
    %269 = vmatprep.mubr.f32.mxu0 0.0
    %270 = vmatmul.mubr.f32.gmra.mxu0 %v190
    %v271 = vpop.f32.mrf.mxu0
    %v272 = vadd.f32 0.0, %v271
    %v273 = vpop.f32.mrf.mxu0
    %274 = vmatprep.mubr.f32.mxu0 0.0
    %275 = vmatmul.mubr.f32.gmra.mxu0 %v193
    %v276 = vpop.f32.mrf.mxu0
    %v277 = vadd.f32 0.0, %v276
    %v278 = vpop.f32.mrf.mxu0
    %279 = vdwg.mxu0
    %v280 = vsel %vm165, %v262, 0.0
    %v281 = vsel %vm165, %v267, 0.0
    %v282 = vadd.f32 %v280, %v281
    %v283 = vsel %vm165, %v272, 0.0
    %v284 = vadd.f32 %v282, %v283
    %v285 = vsel %vm165, %v277, 0.0
    %v286 = vadd.f32 %v284, %v285
    %v287 = vrot.slane %v286, 4
    %v288 = vadd.f32 %v286, %v287
    %v289 = vrot.slane %v288, 2
    %v290 = vadd.f32 %v288, %v289
    %v291 = vrot.slane %v290, 1
    %v292 = vadd.f32 %v290, %v291
    %v293 = vmul.f32 %v178, 0.001953125
    %v294 = vmul.f32 %v292, 0.001953125
    %v295 = vmul.f32 %v293, %v293
    %v296 = vsub.f32 %v294, %v295
    %v297 = vld [vmem:[%s7] sm:$0x1]
    %v298 = vadd.f32 %v296, 1e-05
    %v299 = vrsqrt.pop %v298
    %v300 = vmul.f32 %v297, %v299
    %v301 = vld [vmem:[%s8] sm:$0x1]
    %v302 = vmul.f32 %v293, %v300
    %v303 = vsub.f32 %v301, %v302
    %v305 = vlaneseq
    %v306 = vshrl.u32 %v305, 7
    %v307 = vsub.s32 0, %v306
    %v308 = vrot.slane %v300, %v307
    %309 = vrot.lane.b32.xlu0 %v308, 4
    %v310 = vpop.permute.xlu0 %309
    %312 = vrot.lane.b32.xlu0 %v308, 8
    %v313 = vpop.permute.xlu0 %312
    %315 = vrot.lane.b32.xlu0 %v308, 12
    %v316 = vpop.permute.xlu0 %315
    %318 = vrot.lane.b32.xlu0 %v308, 16
    %v319 = vpop.permute.xlu0 %318
    %321 = vrot.lane.b32.xlu0 %v308, 20
    %v322 = vpop.permute.xlu0 %321
    %324 = vrot.lane.b32.xlu0 %v308, 24
    %v325 = vpop.permute.xlu0 %324
    %327 = vrot.lane.b32.xlu0 %v308, 28
    %v328 = vpop.permute.xlu0 %327
    %330 = vrot.lane.b32.xlu0 %v308, 32
    %v331 = vpop.permute.xlu0 %330
    %333 = vrot.lane.b32.xlu0 %v308, 36
    %v334 = vpop.permute.xlu0 %333
    %336 = vrot.lane.b32.xlu0 %v308, 40
    %v337 = vpop.permute.xlu0 %336
    %339 = vrot.lane.b32.xlu0 %v308, 44
    %v340 = vpop.permute.xlu0 %339
    %342 = vrot.lane.b32.xlu0 %v308, 48
    %v343 = vpop.permute.xlu0 %342
    %345 = vrot.lane.b32.xlu0 %v308, 52
    %v346 = vpop.permute.xlu0 %345
    %348 = vrot.lane.b32.xlu0 %v308, 56
    %v349 = vpop.permute.xlu0 %348
    %351 = vrot.lane.b32.xlu0 %v308, 60
    %v352 = vpop.permute.xlu0 %351
    %v354 = vsel %vm165, %v300, %v310
    %vm355 = vcmask 64512
    %v356 = vsel %vm355, %v354, %v313
    %vm357 = vcmask 97280
    %v358 = vsel %vm357, %v356, %v316
    %vm359 = vcmask 130048
    %v360 = vsel %vm359, %v358, %v319
    %vm361 = vcmask 162816
    %v362 = vsel %vm361, %v360, %v322
    %vm363 = vcmask 195584
    %v364 = vsel %vm363, %v362, %v325
    %vm365 = vcmask 228352
    %v366 = vsel %vm365, %v364, %v328
    %vm367 = vcmask 261120
    %v368 = vsel %vm367, %v366, %v331
    %vm369 = vcmask 293888
    %v370 = vsel %vm369, %v368, %v334
    %vm371 = vcmask 326656
    %v372 = vsel %vm371, %v370, %v337
    %vm373 = vcmask 359424
    %v374 = vsel %vm373, %v372, %v340
    %vm375 = vcmask 392192
    %v376 = vsel %vm375, %v374, %v343
    %vm377 = vcmask 424960
    %v378 = vsel %vm377, %v376, %v346
    %vm379 = vcmask 457728
    %v380 = vsel %vm379, %v378, %v349
    %vm381 = vcmask 490496
    %v382 = vsel %vm381, %v380, %v352
    %v384 = vlaneseq
    %v385 = vshrl.u32 %v384, 7
    %v386 = vsub.s32 0, %v385
    %v387 = vrot.slane %v303, %v386
    %388 = vrot.lane.b32.xlu0 %v387, 4
    %v389 = vpop.permute.xlu0 %388
    %391 = vrot.lane.b32.xlu0 %v387, 8
    %v392 = vpop.permute.xlu0 %391
    %394 = vrot.lane.b32.xlu0 %v387, 12
    %v395 = vpop.permute.xlu0 %394
    %397 = vrot.lane.b32.xlu0 %v387, 16
    %v398 = vpop.permute.xlu0 %397
    %400 = vrot.lane.b32.xlu0 %v387, 20
    %v401 = vpop.permute.xlu0 %400
    %403 = vrot.lane.b32.xlu0 %v387, 24
    %v404 = vpop.permute.xlu0 %403
    %406 = vrot.lane.b32.xlu0 %v387, 28
    %v407 = vpop.permute.xlu0 %406
    %409 = vrot.lane.b32.xlu0 %v387, 32
    %v410 = vpop.permute.xlu0 %409
    %412 = vrot.lane.b32.xlu0 %v387, 36
    %v413 = vpop.permute.xlu0 %412
    %415 = vrot.lane.b32.xlu0 %v387, 40
    %v416 = vpop.permute.xlu0 %415
    %418 = vrot.lane.b32.xlu0 %v387, 44
    %v419 = vpop.permute.xlu0 %418
    %421 = vrot.lane.b32.xlu0 %v387, 48
    %v422 = vpop.permute.xlu0 %421
    %424 = vrot.lane.b32.xlu0 %v387, 52
    %v425 = vpop.permute.xlu0 %424
    %427 = vrot.lane.b32.xlu0 %v387, 56
    %v428 = vpop.permute.xlu0 %427
    %430 = vrot.lane.b32.xlu0 %v387, 60
    %v431 = vpop.permute.xlu0 %430
    %v433 = vsel %vm165, %v303, %v389
    %v434 = vsel %vm355, %v433, %v392
    %v435 = vsel %vm357, %v434, %v395
    %v436 = vsel %vm359, %v435, %v398
    %v437 = vsel %vm361, %v436, %v401
    %v438 = vsel %vm363, %v437, %v404
    %v439 = vsel %vm365, %v438, %v407
    %v440 = vsel %vm367, %v439, %v410
    %v441 = vsel %vm369, %v440, %v413
    %v442 = vsel %vm371, %v441, %v416
    %v443 = vsel %vm373, %v442, %v419
    %v444 = vsel %vm375, %v443, %v422
    %v445 = vsel %vm377, %v444, %v425
    %v446 = vsel %vm379, %v445, %v428
    %v447 = vsel %vm381, %v446, %v431
    %v448 = vlaneseq
    %v449 = vshrl.u32 %v448, 7
    %v450 = vsub.s32 0, %v449
    %v451 = vrot.slane %v382, %v450
    %v452 = vmul.f32 %v55, %v451
    %v453 = vmul.f32 %v56, %v451
    %v454 = vmul.f32 %v57, %v451
    %v455 = vmul.f32 %v58, %v451
    %v456 = vlaneseq
    %v457 = vshrl.u32 %v456, 7
    %v458 = vsub.s32 0, %v457
    %v459 = vrot.slane %v447, %v458
    %v460 = vadd.f32 %v452, %v459
    %v461 = vadd.f32 %v453, %v459
    %v462 = vadd.f32 %v454, %v459
    %v463 = vadd.f32 %v455, %v459
    %v464 = vmax.f32 %v460, 0.0
    %v465 = vmax.f32 %v461, 0.0
    %v466 = vmax.f32 %v462, 0.0
    %v467 = vmax.f32 %v463, 0.0
    %v468 = vld [vmem:[%s11] sm:$0x7]
    %v469 = vld [vmem:[%s1] sm:$0xff]
    %v470 = vld [vmem:[%s1 + $0x8] sm:$0xff]
    %v471 = vld [vmem:[%s1 + $0x10] sm:$0xff]
    %v472 = vld [vmem:[%s1 + $0x18] sm:$0xff]
    %v473 = vld [vmem:[%s1 + $0x20] sm:$0xff]
    %v474 = vld [vmem:[%s1 + $0x28] sm:$0xff]
    %v475 = vld [vmem:[%s1 + $0x30] sm:$0xff]
    %v476 = vld [vmem:[%s1 + $0x38] sm:$0xff]
    %v477 = vld [vmem:[%s1 + $0x40] sm:$0xff]
    %v478 = vld [vmem:[%s1 + $0x48] sm:$0xff]
    %v479 = vld [vmem:[%s1 + $0x50] sm:$0xff]
    %v480 = vld [vmem:[%s1 + $0x58] sm:$0xff]
    %v481 = vld [vmem:[%s1 + $0x60] sm:$0xff]
    %v482 = vld [vmem:[%s1 + $0x68] sm:$0xff]
    %v483 = vld [vmem:[%s1 + $0x70] sm:$0xff]
    %v484 = vld [vmem:[%s1 + $0x78] sm:$0xff]
    %v486 = vsel %vm67, %v464, 0
    %v489 = vsel %vm67, %v465, 0
    %v492 = vsel %vm67, %v466, 0
    %v495 = vsel %vm67, %v467, 0
    %497 = vmatprep.subr.mxu0 0.0
    %498 = vmatpush1.msra.mxu0 0.0
    %499 = vmatprep.subr.mxu0 0.0
    %500 = vmatpush1.msra.mxu0 0.0
    %501 = vmatprep.subr.mxu0 0.0
    %502 = vmatpush1.msra.mxu0 0.0
    %503 = vmatprep.subr.mxu0 0.0
    %504 = vmatpush1.msra.mxu0 0.0
    %505 = vmatprep.subr.mxu0 0.0
    %506 = vmatpush1.msra.mxu0 0.0
    %507 = vmatprep.subr.mxu0 0.0
    %508 = vmatpush1.msra.mxu0 0.0
    %509 = vmatprep.subr.mxu0 0.0
    %510 = vmatpush1.msra.mxu0 0.0
    %511 = vmatprep.subr.mxu0 0.0
    %512 = vmatpush1.msra.mxu0 0.0
    %513 = vmatprep.subr.mxu0 %v484
    %514 = vmatpush1.msra.mxu0 %v483
    %515 = vmatprep.subr.mxu0 %v482
    %516 = vmatpush1.msra.mxu0 %v481
    %517 = vmatprep.subr.mxu0 %v480
    %518 = vmatpush1.msra.mxu0 %v479
    %519 = vmatprep.subr.mxu0 %v478
    %520 = vmatpush1.msra.mxu0 %v477
    %521 = vmatprep.subr.mxu0 %v476
    %522 = vmatpush1.msra.mxu0 %v475
    %523 = vmatprep.subr.mxu0 %v474
    %524 = vmatpush1.msra.mxu0 %v473
    %525 = vmatprep.subr.mxu0 %v472
    %526 = vmatpush1.msra.mxu0 %v471
    %527 = vmatprep.subr.mxu0 %v470
    %528 = vmatpush1.msra.mxu0 %v469
    %529 = vmatprep.subr.mxu0 0.0
    %530 = vmatpush2.msra.mxu0 0.0
    %531 = vmatprep.subr.mxu0 0.0
    %532 = vmatpush2.msra.mxu0 0.0
    %533 = vmatprep.subr.mxu0 0.0
    %534 = vmatpush2.msra.mxu0 0.0
    %535 = vmatprep.subr.mxu0 0.0
    %536 = vmatpush2.msra.mxu0 0.0
    %537 = vmatprep.subr.mxu0 0.0
    %538 = vmatpush2.msra.mxu0 0.0
    %539 = vmatprep.subr.mxu0 0.0
    %540 = vmatpush2.msra.mxu0 0.0
    %541 = vmatprep.subr.mxu0 0.0
    %542 = vmatpush2.msra.mxu0 0.0
    %543 = vmatprep.subr.mxu0 0.0
    %544 = vmatpush2.msra.mxu0 0.0
    %545 = vmatprep.subr.mxu0 0.0
    %546 = vmatpush2.msra.mxu0 0.0
    %547 = vmatprep.subr.mxu0 0.0
    %548 = vmatpush2.msra.mxu0 0.0
    %549 = vmatprep.subr.mxu0 0.0
    %550 = vmatpush2.msra.mxu0 0.0
    %551 = vmatprep.subr.mxu0 0.0
    %552 = vmatpush2.msra.mxu0 0.0
    %553 = vmatprep.subr.mxu0 0.0
    %554 = vmatpush2.msra.mxu0 0.0
    %555 = vmatprep.subr.mxu0 0.0
    %556 = vmatpush2.msra.mxu0 0.0
    %557 = vmatprep.subr.mxu0 0.0
    %558 = vmatpush2.msra.mxu0 0.0
    %559 = vmatprep.subr.mxu0 0.0
    %560 = vmatpush2.msra.mxu0 0.0
    %561 = vmatprep.mubr.f32.mxu0 0.0
    %562 = vmatmul.mubr.f32.gmra.mxu0 %v486
    %v563 = vpop.f32.mrf.mxu0
    %v564 = vadd.f32 0.0, %v563
    %v565 = vpop.f32.mrf.mxu0
    %v566 = vadd.f32 0.0, %v565
    %567 = vmatprep.mubr.f32.mxu0 0.0
    %568 = vmatmul.mubr.f32.gmra.mxu0 %v489
    %v569 = vpop.f32.mrf.mxu0
    %v570 = vadd.f32 0.0, %v569
    %v571 = vpop.f32.mrf.mxu0
    %v572 = vadd.f32 0.0, %v571
    %573 = vmatprep.mubr.f32.mxu0 0.0
    %574 = vmatmul.mubr.f32.gmra.mxu0 %v492
    %v575 = vpop.f32.mrf.mxu0
    %v576 = vadd.f32 0.0, %v575
    %v577 = vpop.f32.mrf.mxu0
    %v578 = vadd.f32 0.0, %v577
    %579 = vmatprep.mubr.f32.mxu0 0.0
    %580 = vmatmul.mubr.f32.gmra.mxu0 %v495
    %v581 = vpop.f32.mrf.mxu0
    %v582 = vadd.f32 0.0, %v581
    %v583 = vpop.f32.mrf.mxu0
    %v584 = vadd.f32 0.0, %v583
    %585 = vdwg.mxu0
    %v586 = vld [vmem:[%s2] sm:$0xff]
    %v587 = vld [vmem:[%s2 + $0x8] sm:$0xff]
    %s588 = scalar_lea.vmem %s1, 128
    %v589 = vld [vmem:[%s588] sm:$0xff]
    %v590 = vld [vmem:[%s588 + $0x8] sm:$0xff]
    %v591 = vld [vmem:[%s588 + $0x10] sm:$0xff]
    %v592 = vld [vmem:[%s588 + $0x18] sm:$0xff]
    %v593 = vld [vmem:[%s588 + $0x20] sm:$0xff]
    %v594 = vld [vmem:[%s588 + $0x28] sm:$0xff]
    %v595 = vld [vmem:[%s588 + $0x30] sm:$0xff]
    %v596 = vld [vmem:[%s588 + $0x38] sm:$0xff]
    %v597 = vld [vmem:[%s588 + $0x40] sm:$0xff]
    %v598 = vld [vmem:[%s588 + $0x48] sm:$0xff]
    %v599 = vld [vmem:[%s588 + $0x50] sm:$0xff]
    %v600 = vld [vmem:[%s588 + $0x58] sm:$0xff]
    %v601 = vld [vmem:[%s588 + $0x60] sm:$0xff]
    %v602 = vld [vmem:[%s588 + $0x68] sm:$0xff]
    %v603 = vld [vmem:[%s588 + $0x70] sm:$0xff]
    %v604 = vld [vmem:[%s588 + $0x78] sm:$0xff]
    %605 = vmatprep.subr.mxu0 0.0
    %606 = vmatpush1.msra.mxu0 0.0
    %607 = vmatprep.subr.mxu0 0.0
    %608 = vmatpush1.msra.mxu0 0.0
    %609 = vmatprep.subr.mxu0 0.0
    %610 = vmatpush1.msra.mxu0 0.0
    %611 = vmatprep.subr.mxu0 0.0
    %612 = vmatpush1.msra.mxu0 0.0
    %613 = vmatprep.subr.mxu0 0.0
    %614 = vmatpush1.msra.mxu0 0.0
    %615 = vmatprep.subr.mxu0 0.0
    %616 = vmatpush1.msra.mxu0 0.0
    %617 = vmatprep.subr.mxu0 0.0
    %618 = vmatpush1.msra.mxu0 0.0
    %619 = vmatprep.subr.mxu0 0.0
    %620 = vmatpush1.msra.mxu0 0.0
    %621 = vmatprep.subr.mxu0 %v604
    %622 = vmatpush1.msra.mxu0 %v603
    %623 = vmatprep.subr.mxu0 %v602
    %624 = vmatpush1.msra.mxu0 %v601
    %625 = vmatprep.subr.mxu0 %v600
    %626 = vmatpush1.msra.mxu0 %v599
    %627 = vmatprep.subr.mxu0 %v598
    %628 = vmatpush1.msra.mxu0 %v597
    %629 = vmatprep.subr.mxu0 %v596
    %630 = vmatpush1.msra.mxu0 %v595
    %631 = vmatprep.subr.mxu0 %v594
    %632 = vmatpush1.msra.mxu0 %v593
    %633 = vmatprep.subr.mxu0 %v592
    %634 = vmatpush1.msra.mxu0 %v591
    %635 = vmatprep.subr.mxu0 %v590
    %636 = vmatpush1.msra.mxu0 %v589
    %637 = vmatprep.subr.mxu0 0.0
    %638 = vmatpush2.msra.mxu0 0.0
    %639 = vmatprep.subr.mxu0 0.0
    %640 = vmatpush2.msra.mxu0 0.0
    %641 = vmatprep.subr.mxu0 0.0
    %642 = vmatpush2.msra.mxu0 0.0
    %643 = vmatprep.subr.mxu0 0.0
    %644 = vmatpush2.msra.mxu0 0.0
    %645 = vmatprep.subr.mxu0 0.0
    %646 = vmatpush2.msra.mxu0 0.0
    %647 = vmatprep.subr.mxu0 0.0
    %648 = vmatpush2.msra.mxu0 0.0
    %649 = vmatprep.subr.mxu0 0.0
    %650 = vmatpush2.msra.mxu0 0.0
    %651 = vmatprep.subr.mxu0 0.0
    %652 = vmatpush2.msra.mxu0 0.0
    %653 = vmatprep.subr.mxu0 0.0
    %654 = vmatpush2.msra.mxu0 0.0
    %655 = vmatprep.subr.mxu0 0.0
    %656 = vmatpush2.msra.mxu0 0.0
    %657 = vmatprep.subr.mxu0 0.0
    %658 = vmatpush2.msra.mxu0 0.0
    %659 = vmatprep.subr.mxu0 0.0
    %660 = vmatpush2.msra.mxu0 0.0
    %661 = vmatprep.subr.mxu0 0.0
    %662 = vmatpush2.msra.mxu0 0.0
    %663 = vmatprep.subr.mxu0 0.0
    %664 = vmatpush2.msra.mxu0 0.0
    %665 = vmatprep.subr.mxu0 0.0
    %666 = vmatpush2.msra.mxu0 0.0
    %667 = vmatprep.subr.mxu0 0.0
    %668 = vmatpush2.msra.mxu0 0.0
    %669 = vmatprep.mubr.f32.mxu0 0.0
    %670 = vmatmul.mubr.f32.gmra.mxu0 %v486
    %v671 = vpop.f32.mrf.mxu0
    %v672 = vadd.f32 0.0, %v671
    %v673 = vpop.f32.mrf.mxu0
    %v674 = vadd.f32 0.0, %v673
    %675 = vmatprep.mubr.f32.mxu0 0.0
    %676 = vmatmul.mubr.f32.gmra.mxu0 %v489
    %v677 = vpop.f32.mrf.mxu0
    %v678 = vadd.f32 0.0, %v677
    %v679 = vpop.f32.mrf.mxu0
    %v680 = vadd.f32 0.0, %v679
    %681 = vmatprep.mubr.f32.mxu0 0.0
    %682 = vmatmul.mubr.f32.gmra.mxu0 %v492
    %v683 = vpop.f32.mrf.mxu0
    %v684 = vadd.f32 0.0, %v683
    %v685 = vpop.f32.mrf.mxu0
    %v686 = vadd.f32 0.0, %v685
    %687 = vmatprep.mubr.f32.mxu0 0.0
    %688 = vmatmul.mubr.f32.gmra.mxu0 %v495
    %v689 = vpop.f32.mrf.mxu0
    %v690 = vadd.f32 0.0, %v689
    %v691 = vpop.f32.mrf.mxu0
    %v692 = vadd.f32 0.0, %v691
    %693 = vdwg.mxu0
    %s694 = scalar_lea.vmem %s2, 16
    %v695 = vld [vmem:[%s694] sm:$0xff]
    %v696 = vld [vmem:[%s694 + $0x8] sm:$0xff]
    %v698 = vsel %vm367, %v695, 0
    %v701 = vsel %vm367, %v696, 0
    %703 = vmatprep.subr.mxu0 0.0
    %704 = vmatpush1.msra.mxu0 0.0
    %705 = vmatprep.subr.mxu0 0.0
    %706 = vmatpush1.msra.mxu0 0.0
    %707 = vmatprep.subr.mxu0 0.0
    %708 = vmatpush1.msra.mxu0 0.0
    %709 = vmatprep.subr.mxu0 0.0
    %710 = vmatpush1.msra.mxu0 0.0
    %711 = vmatprep.subr.mxu0 0.0
    %712 = vmatpush1.msra.mxu0 0.0
    %713 = vmatprep.subr.mxu0 0.0
    %714 = vmatpush1.msra.mxu0 0.0
    %715 = vmatprep.subr.mxu0 0.0
    %716 = vmatpush1.msra.mxu0 0.0
    %717 = vmatprep.subr.mxu0 0.0
    %718 = vmatpush1.msra.mxu0 0.0
    %719 = vmatprep.subr.mxu0 0.0
    %720 = vmatpush1.msra.mxu0 0.0
    %721 = vmatprep.subr.mxu0 0.0
    %722 = vmatpush1.msra.mxu0 0.0
    %723 = vmatprep.subr.mxu0 0.0
    %724 = vmatpush1.msra.mxu0 0.0
    %725 = vmatprep.subr.mxu0 0.0
    %726 = vmatpush1.msra.mxu0 0.0
    %727 = vmatprep.subr.mxu0 %v692
    %728 = vmatpush1.msra.mxu0 %v690
    %729 = vmatprep.subr.mxu0 %v686
    %730 = vmatpush1.msra.mxu0 %v684
    %731 = vmatprep.subr.mxu0 %v680
    %732 = vmatpush1.msra.mxu0 %v678
    %733 = vmatprep.subr.mxu0 %v674
    %734 = vmatpush1.msra.mxu0 %v672
    %735 = vmatprep.subr.mxu0 0.0
    %736 = vmatpush2.msra.mxu0 0.0
    %737 = vmatprep.subr.mxu0 0.0
    %738 = vmatpush2.msra.mxu0 0.0
    %739 = vmatprep.subr.mxu0 0.0
    %740 = vmatpush2.msra.mxu0 0.0
    %741 = vmatprep.subr.mxu0 0.0
    %742 = vmatpush2.msra.mxu0 0.0
    %743 = vmatprep.subr.mxu0 0.0
    %744 = vmatpush2.msra.mxu0 0.0
    %745 = vmatprep.subr.mxu0 0.0
    %746 = vmatpush2.msra.mxu0 0.0
    %747 = vmatprep.subr.mxu0 0.0
    %748 = vmatpush2.msra.mxu0 0.0
    %749 = vmatprep.subr.mxu0 0.0
    %750 = vmatpush2.msra.mxu0 0.0
    %751 = vmatprep.subr.mxu0 0.0
    %752 = vmatpush2.msra.mxu0 0.0
    %753 = vmatprep.subr.mxu0 0.0
    %754 = vmatpush2.msra.mxu0 0.0
    %755 = vmatprep.subr.mxu0 0.0
    %756 = vmatpush2.msra.mxu0 0.0
    %757 = vmatprep.subr.mxu0 0.0
    %758 = vmatpush2.msra.mxu0 0.0
    %759 = vmatprep.subr.mxu0 0.0
    %760 = vmatpush2.msra.mxu0 0.0
    %761 = vmatprep.subr.mxu0 0.0
    %762 = vmatpush2.msra.mxu0 0.0
    %763 = vmatprep.subr.mxu0 0.0
    %764 = vmatpush2.msra.mxu0 0.0
    %765 = vmatprep.subr.mxu0 0.0
    %766 = vmatpush2.msra.mxu0 0.0
    %767 = vmatprep.mubr.f32.mxu0 0.0
    %768 = vmatmul.mubr.f32.gmra.mxu0 %v698
    %v769 = vpop.f32.mrf.mxu0
    %v770 = vadd.f32 0.0, %v769
    %v771 = vpop.f32.mrf.mxu0
    %v772 = vadd.f32 0.0, %v771
    %773 = vmatprep.mubr.f32.mxu0 0.0
    %774 = vmatmul.mubr.f32.gmra.mxu0 %v701
    %v775 = vpop.f32.mrf.mxu0
    %v776 = vadd.f32 0.0, %v775
    %v777 = vpop.f32.mrf.mxu0
    %v778 = vadd.f32 0.0, %v777
    %779 = vdwg.mxu0
    %v781 = vsel %vm367, %v586, 0
    %v784 = vsel %vm367, %v587, 0
    %786 = vmatprep.subr.mxu0 0.0
    %787 = vmatpush1.msra.mxu0 0.0
    %788 = vmatprep.subr.mxu0 0.0
    %789 = vmatpush1.msra.mxu0 0.0
    %790 = vmatprep.subr.mxu0 0.0
    %791 = vmatpush1.msra.mxu0 0.0
    %792 = vmatprep.subr.mxu0 0.0
    %793 = vmatpush1.msra.mxu0 0.0
    %794 = vmatprep.subr.mxu0 0.0
    %795 = vmatpush1.msra.mxu0 0.0
    %796 = vmatprep.subr.mxu0 0.0
    %797 = vmatpush1.msra.mxu0 0.0
    %798 = vmatprep.subr.mxu0 0.0
    %799 = vmatpush1.msra.mxu0 0.0
    %800 = vmatprep.subr.mxu0 0.0
    %801 = vmatpush1.msra.mxu0 0.0
    %802 = vmatprep.subr.mxu0 0.0
    %803 = vmatpush1.msra.mxu0 0.0
    %804 = vmatprep.subr.mxu0 0.0
    %805 = vmatpush1.msra.mxu0 0.0
    %806 = vmatprep.subr.mxu0 0.0
    %807 = vmatpush1.msra.mxu0 0.0
    %808 = vmatprep.subr.mxu0 0.0
    %809 = vmatpush1.msra.mxu0 0.0
    %810 = vmatprep.subr.mxu0 %v584
    %811 = vmatpush1.msra.mxu0 %v582
    %812 = vmatprep.subr.mxu0 %v578
    %813 = vmatpush1.msra.mxu0 %v576
    %814 = vmatprep.subr.mxu0 %v572
    %815 = vmatpush1.msra.mxu0 %v570
    %816 = vmatprep.subr.mxu0 %v566
    %817 = vmatpush1.msra.mxu0 %v564
    %818 = vmatprep.subr.mxu0 0.0
    %819 = vmatpush2.msra.mxu0 0.0
    %820 = vmatprep.subr.mxu0 0.0
    %821 = vmatpush2.msra.mxu0 0.0
    %822 = vmatprep.subr.mxu0 0.0
    %823 = vmatpush2.msra.mxu0 0.0
    %824 = vmatprep.subr.mxu0 0.0
    %825 = vmatpush2.msra.mxu0 0.0
    %826 = vmatprep.subr.mxu0 0.0
    %827 = vmatpush2.msra.mxu0 0.0
    %828 = vmatprep.subr.mxu0 0.0
    %829 = vmatpush2.msra.mxu0 0.0
    %830 = vmatprep.subr.mxu0 0.0
    %831 = vmatpush2.msra.mxu0 0.0
    %832 = vmatprep.subr.mxu0 0.0
    %833 = vmatpush2.msra.mxu0 0.0
    %834 = vmatprep.subr.mxu0 0.0
    %835 = vmatpush2.msra.mxu0 0.0
    %836 = vmatprep.subr.mxu0 0.0
    %837 = vmatpush2.msra.mxu0 0.0
    %838 = vmatprep.subr.mxu0 0.0
    %839 = vmatpush2.msra.mxu0 0.0
    %840 = vmatprep.subr.mxu0 0.0
    %841 = vmatpush2.msra.mxu0 0.0
    %842 = vmatprep.subr.mxu0 0.0
    %843 = vmatpush2.msra.mxu0 0.0
    %844 = vmatprep.subr.mxu0 0.0
    %845 = vmatpush2.msra.mxu0 0.0
    %846 = vmatprep.subr.mxu0 0.0
    %847 = vmatpush2.msra.mxu0 0.0
    %848 = vmatprep.subr.mxu0 0.0
    %849 = vmatpush2.msra.mxu0 0.0
    %850 = vmatprep.mubr.f32.mxu0 0.0
    %851 = vmatmul.mubr.f32.gmra.mxu0 %v781
    %v852 = vpop.f32.mrf.mxu0
    %v853 = vadd.f32 %v770, %v852
    %v854 = vpop.f32.mrf.mxu0
    %v855 = vadd.f32 %v772, %v854
    %856 = vmatprep.mubr.f32.mxu0 0.0
    %857 = vmatmul.mubr.f32.gmra.mxu0 %v784
    %v858 = vpop.f32.mrf.mxu0
    %v859 = vadd.f32 %v776, %v858
    %v860 = vpop.f32.mrf.mxu0
    %v861 = vadd.f32 %v778, %v860
    %862 = vdwg.mxu0
    %s863 = scalar_lea.vmem %s1, 256
    %v864 = vld [vmem:[%s863] sm:$0xff]
    %v865 = vld [vmem:[%s863 + $0x8] sm:$0xff]
    %v866 = vld [vmem:[%s863 + $0x10] sm:$0xff]
    %v867 = vld [vmem:[%s863 + $0x18] sm:$0xff]
    %v868 = vld [vmem:[%s863 + $0x20] sm:$0xff]
    %v869 = vld [vmem:[%s863 + $0x28] sm:$0xff]
    %v870 = vld [vmem:[%s863 + $0x30] sm:$0xff]
    %v871 = vld [vmem:[%s863 + $0x38] sm:$0xff]
    %v872 = vld [vmem:[%s863 + $0x40] sm:$0xff]
    %v873 = vld [vmem:[%s863 + $0x48] sm:$0xff]
    %v874 = vld [vmem:[%s863 + $0x50] sm:$0xff]
    %v875 = vld [vmem:[%s863 + $0x58] sm:$0xff]
    %v876 = vld [vmem:[%s863 + $0x60] sm:$0xff]
    %v877 = vld [vmem:[%s863 + $0x68] sm:$0xff]
    %v878 = vld [vmem:[%s863 + $0x70] sm:$0xff]
    %v879 = vld [vmem:[%s863 + $0x78] sm:$0xff]
    %880 = vmatprep.subr.mxu0 0.0
    %881 = vmatpush1.msra.mxu0 0.0
    %882 = vmatprep.subr.mxu0 0.0
    %883 = vmatpush1.msra.mxu0 0.0
    %884 = vmatprep.subr.mxu0 0.0
    %885 = vmatpush1.msra.mxu0 0.0
    %886 = vmatprep.subr.mxu0 0.0
    %887 = vmatpush1.msra.mxu0 0.0
    %888 = vmatprep.subr.mxu0 0.0
    %889 = vmatpush1.msra.mxu0 0.0
    %890 = vmatprep.subr.mxu0 0.0
    %891 = vmatpush1.msra.mxu0 0.0
    %892 = vmatprep.subr.mxu0 0.0
    %893 = vmatpush1.msra.mxu0 0.0
    %894 = vmatprep.subr.mxu0 0.0
    %895 = vmatpush1.msra.mxu0 0.0
    %896 = vmatprep.subr.mxu0 %v879
    %897 = vmatpush1.msra.mxu0 %v878
    %898 = vmatprep.subr.mxu0 %v877
    %899 = vmatpush1.msra.mxu0 %v876
    %900 = vmatprep.subr.mxu0 %v875
    %901 = vmatpush1.msra.mxu0 %v874
    %902 = vmatprep.subr.mxu0 %v873
    %903 = vmatpush1.msra.mxu0 %v872
    %904 = vmatprep.subr.mxu0 %v871
    %905 = vmatpush1.msra.mxu0 %v870
    %906 = vmatprep.subr.mxu0 %v869
    %907 = vmatpush1.msra.mxu0 %v868
    %908 = vmatprep.subr.mxu0 %v867
    %909 = vmatpush1.msra.mxu0 %v866
    %910 = vmatprep.subr.mxu0 %v865
    %911 = vmatpush1.msra.mxu0 %v864
    %912 = vmatprep.subr.mxu0 0.0
    %913 = vmatpush2.msra.mxu0 0.0
    %914 = vmatprep.subr.mxu0 0.0
    %915 = vmatpush2.msra.mxu0 0.0
    %916 = vmatprep.subr.mxu0 0.0
    %917 = vmatpush2.msra.mxu0 0.0
    %918 = vmatprep.subr.mxu0 0.0
    %919 = vmatpush2.msra.mxu0 0.0
    %920 = vmatprep.subr.mxu0 0.0
    %921 = vmatpush2.msra.mxu0 0.0
    %922 = vmatprep.subr.mxu0 0.0
    %923 = vmatpush2.msra.mxu0 0.0
    %924 = vmatprep.subr.mxu0 0.0
    %925 = vmatpush2.msra.mxu0 0.0
    %926 = vmatprep.subr.mxu0 0.0
    %927 = vmatpush2.msra.mxu0 0.0
    %928 = vmatprep.subr.mxu0 0.0
    %929 = vmatpush2.msra.mxu0 0.0
    %930 = vmatprep.subr.mxu0 0.0
    %931 = vmatpush2.msra.mxu0 0.0
    %932 = vmatprep.subr.mxu0 0.0
    %933 = vmatpush2.msra.mxu0 0.0
    %934 = vmatprep.subr.mxu0 0.0
    %935 = vmatpush2.msra.mxu0 0.0
    %936 = vmatprep.subr.mxu0 0.0
    %937 = vmatpush2.msra.mxu0 0.0
    %938 = vmatprep.subr.mxu0 0.0
    %939 = vmatpush2.msra.mxu0 0.0
    %940 = vmatprep.subr.mxu0 0.0
    %941 = vmatpush2.msra.mxu0 0.0
    %942 = vmatprep.subr.mxu0 0.0
    %943 = vmatpush2.msra.mxu0 0.0
    %944 = vmatprep.mubr.f32.mxu0 0.0
    %945 = vmatmul.mubr.f32.gmra.mxu0 %v486
    %v946 = vpop.f32.mrf.mxu0
    %v947 = vadd.f32 0.0, %v946
    %v948 = vpop.f32.mrf.mxu0
    %v949 = vadd.f32 0.0, %v948
    %950 = vmatprep.mubr.f32.mxu0 0.0
    %951 = vmatmul.mubr.f32.gmra.mxu0 %v489
    %v952 = vpop.f32.mrf.mxu0
    %v953 = vadd.f32 0.0, %v952
    %v954 = vpop.f32.mrf.mxu0
    %v955 = vadd.f32 0.0, %v954
    %956 = vmatprep.mubr.f32.mxu0 0.0
    %957 = vmatmul.mubr.f32.gmra.mxu0 %v492
    %v958 = vpop.f32.mrf.mxu0
    %v959 = vadd.f32 0.0, %v958
    %v960 = vpop.f32.mrf.mxu0
    %v961 = vadd.f32 0.0, %v960
    %962 = vmatprep.mubr.f32.mxu0 0.0
    %963 = vmatmul.mubr.f32.gmra.mxu0 %v495
    %v964 = vpop.f32.mrf.mxu0
    %v965 = vadd.f32 0.0, %v964
    %v966 = vpop.f32.mrf.mxu0
    %v967 = vadd.f32 0.0, %v966
    %968 = vdwg.mxu0
    %s969 = scalar_lea.vmem %s2, 32
    %v970 = vld [vmem:[%s969] sm:$0xff]
    %v971 = vld [vmem:[%s969 + $0x8] sm:$0xff]
    %v973 = vsel %vm367, %v970, 0
    %v976 = vsel %vm367, %v971, 0
    %978 = vmatprep.subr.mxu0 0.0
    %979 = vmatpush1.msra.mxu0 0.0
    %980 = vmatprep.subr.mxu0 0.0
    %981 = vmatpush1.msra.mxu0 0.0
    %982 = vmatprep.subr.mxu0 0.0
    %983 = vmatpush1.msra.mxu0 0.0
    %984 = vmatprep.subr.mxu0 0.0
    %985 = vmatpush1.msra.mxu0 0.0
    %986 = vmatprep.subr.mxu0 0.0
    %987 = vmatpush1.msra.mxu0 0.0
    %988 = vmatprep.subr.mxu0 0.0
    %989 = vmatpush1.msra.mxu0 0.0
    %990 = vmatprep.subr.mxu0 0.0
    %991 = vmatpush1.msra.mxu0 0.0
    %992 = vmatprep.subr.mxu0 0.0
    %993 = vmatpush1.msra.mxu0 0.0
    %994 = vmatprep.subr.mxu0 0.0
    %995 = vmatpush1.msra.mxu0 0.0
    %996 = vmatprep.subr.mxu0 0.0
    %997 = vmatpush1.msra.mxu0 0.0
    %998 = vmatprep.subr.mxu0 0.0
    %999 = vmatpush1.msra.mxu0 0.0
    %1000 = vmatprep.subr.mxu0 0.0
    %1001 = vmatpush1.msra.mxu0 0.0
    %1002 = vmatprep.subr.mxu0 %v967
    %1003 = vmatpush1.msra.mxu0 %v965
    %1004 = vmatprep.subr.mxu0 %v961
    %1005 = vmatpush1.msra.mxu0 %v959
    %1006 = vmatprep.subr.mxu0 %v955
    %1007 = vmatpush1.msra.mxu0 %v953
    %1008 = vmatprep.subr.mxu0 %v949
    %1009 = vmatpush1.msra.mxu0 %v947
    %1010 = vmatprep.subr.mxu0 0.0
    %1011 = vmatpush2.msra.mxu0 0.0
    %1012 = vmatprep.subr.mxu0 0.0
    %1013 = vmatpush2.msra.mxu0 0.0
    %1014 = vmatprep.subr.mxu0 0.0
    %1015 = vmatpush2.msra.mxu0 0.0
    %1016 = vmatprep.subr.mxu0 0.0
    %1017 = vmatpush2.msra.mxu0 0.0
    %1018 = vmatprep.subr.mxu0 0.0
    %1019 = vmatpush2.msra.mxu0 0.0
    %1020 = vmatprep.subr.mxu0 0.0
    %1021 = vmatpush2.msra.mxu0 0.0
    %1022 = vmatprep.subr.mxu0 0.0
    %1023 = vmatpush2.msra.mxu0 0.0
    %1024 = vmatprep.subr.mxu0 0.0
    %1025 = vmatpush2.msra.mxu0 0.0
    %1026 = vmatprep.subr.mxu0 0.0
    %1027 = vmatpush2.msra.mxu0 0.0
    %1028 = vmatprep.subr.mxu0 0.0
    %1029 = vmatpush2.msra.mxu0 0.0
    %1030 = vmatprep.subr.mxu0 0.0
    %1031 = vmatpush2.msra.mxu0 0.0
    %1032 = vmatprep.subr.mxu0 0.0
    %1033 = vmatpush2.msra.mxu0 0.0
    %1034 = vmatprep.subr.mxu0 0.0
    %1035 = vmatpush2.msra.mxu0 0.0
    %1036 = vmatprep.subr.mxu0 0.0
    %1037 = vmatpush2.msra.mxu0 0.0
    %1038 = vmatprep.subr.mxu0 0.0
    %1039 = vmatpush2.msra.mxu0 0.0
    %1040 = vmatprep.subr.mxu0 0.0
    %1041 = vmatpush2.msra.mxu0 0.0
    %1042 = vmatprep.mubr.f32.mxu0 0.0
    %1043 = vmatmul.mubr.f32.gmra.mxu0 %v973
    %v1044 = vpop.f32.mrf.mxu0
    %v1045 = vadd.f32 0.0, %v1044
    %v1046 = vpop.f32.mrf.mxu0
    %v1047 = vadd.f32 0.0, %v1046
    %1048 = vmatprep.mubr.f32.mxu0 0.0
    %1049 = vmatmul.mubr.f32.gmra.mxu0 %v976
    %v1050 = vpop.f32.mrf.mxu0
    %v1051 = vadd.f32 0.0, %v1050
    %v1052 = vpop.f32.mrf.mxu0
    %v1053 = vadd.f32 0.0, %v1052
    %1054 = vdwg.mxu0
    %v1055 = vadd.f32 %v853, %v1045
    %v1056 = vadd.f32 %v855, %v1047
    %v1057 = vadd.f32 %v859, %v1051
    %v1058 = vadd.f32 %v861, %v1053
    %v1059 = vlaneseq
    %v1060 = vshrl.u32 %v1059, 7
    %v1061 = vsub.s32 0, %v1060
    %v1062 = vrot.slane %v468, %v1061
    %v1063 = vadd.f32 %v1055, %v1062
    %v1064 = vadd.f32 %v1057, %v1062
    %v1065 = vlaneseq
    %v1066 = vshrl.u32 %v1065, 7
    %v1067 = vsub.s32 1, %v1066
    %v1068 = vrot.slane %v468, %v1067
    %v1069 = vadd.f32 %v1056, %v1068
    %v1070 = vadd.f32 %v1058, %v1068
    %v1071 = vld [vmem:[%s6] sm:$0xff]
    %v1072 = vld [vmem:[%s6 + $0x8] sm:$0xff]
    %v1073 = vld [vmem:[%s6 + $0x10] sm:$0xff]
    %v1074 = vld [vmem:[%s6 + $0x18] sm:$0xff]
    %v1075 = vld [vmem:[%s6 + $0x20] sm:$0xff]
    %v1076 = vld [vmem:[%s6 + $0x28] sm:$0xff]
    %v1077 = vld [vmem:[%s6 + $0x30] sm:$0xff]
    %v1078 = vld [vmem:[%s6 + $0x38] sm:$0xff]
    %v1079 = vld [vmem:[%s6 + $0x40] sm:$0xff]
    %v1080 = vld [vmem:[%s6 + $0x48] sm:$0xff]
    %v1081 = vld [vmem:[%s6 + $0x50] sm:$0xff]
    %v1082 = vld [vmem:[%s6 + $0x58] sm:$0xff]
    %v1083 = vld [vmem:[%s6 + $0x60] sm:$0xff]
    %v1084 = vld [vmem:[%s6 + $0x68] sm:$0xff]
    %v1085 = vld [vmem:[%s6 + $0x70] sm:$0xff]
    %v1086 = vld [vmem:[%s6 + $0x78] sm:$0xff]
    %1087 = vmatprep.subr.mxu0 0.0
    %1088 = vmatpush1.msra.mxu0 %v1086
    %1089 = vmatprep.subr.mxu0 0.0
    %1090 = vmatpush1.msra.mxu0 %v1085
    %1091 = vmatprep.subr.mxu0 0.0
    %1092 = vmatpush1.msra.mxu0 %v1084
    %1093 = vmatprep.subr.mxu0 0.0
    %1094 = vmatpush1.msra.mxu0 %v1083
    %1095 = vmatprep.subr.mxu0 0.0
    %1096 = vmatpush1.msra.mxu0 %v1082
    %1097 = vmatprep.subr.mxu0 0.0
    %1098 = vmatpush1.msra.mxu0 %v1081
    %1099 = vmatprep.subr.mxu0 0.0
    %1100 = vmatpush1.msra.mxu0 %v1080
    %1101 = vmatprep.subr.mxu0 0.0
    %1102 = vmatpush1.msra.mxu0 %v1079
    %1103 = vmatprep.subr.mxu0 0.0
    %1104 = vmatpush1.msra.mxu0 %v1078
    %1105 = vmatprep.subr.mxu0 0.0
    %1106 = vmatpush1.msra.mxu0 %v1077
    %1107 = vmatprep.subr.mxu0 0.0
    %1108 = vmatpush1.msra.mxu0 %v1076
    %1109 = vmatprep.subr.mxu0 0.0
    %1110 = vmatpush1.msra.mxu0 %v1075
    %1111 = vmatprep.subr.mxu0 0.0
    %1112 = vmatpush1.msra.mxu0 %v1074
    %1113 = vmatprep.subr.mxu0 0.0
    %1114 = vmatpush1.msra.mxu0 %v1073
    %1115 = vmatprep.subr.mxu0 0.0
    %1116 = vmatpush1.msra.mxu0 %v1072
    %1117 = vmatprep.subr.mxu0 0.0
    %1118 = vmatpush1.msra.mxu0 %v1071
    %1119 = vmatprep.subr.mxu0 0.0
    %1120 = vmatpush2.msra.mxu0 0.0
    %1121 = vmatprep.subr.mxu0 0.0
    %1122 = vmatpush2.msra.mxu0 0.0
    %1123 = vmatprep.subr.mxu0 0.0
    %1124 = vmatpush2.msra.mxu0 0.0
    %1125 = vmatprep.subr.mxu0 0.0
    %1126 = vmatpush2.msra.mxu0 0.0
    %1127 = vmatprep.subr.mxu0 0.0
    %1128 = vmatpush2.msra.mxu0 0.0
    %1129 = vmatprep.subr.mxu0 0.0
    %1130 = vmatpush2.msra.mxu0 0.0
    %1131 = vmatprep.subr.mxu0 0.0
    %1132 = vmatpush2.msra.mxu0 0.0
    %1133 = vmatprep.subr.mxu0 0.0
    %1134 = vmatpush2.msra.mxu0 0.0
    %1135 = vmatprep.subr.mxu0 0.0
    %1136 = vmatpush2.msra.mxu0 0.0
    %1137 = vmatprep.subr.mxu0 0.0
    %1138 = vmatpush2.msra.mxu0 0.0
    %1139 = vmatprep.subr.mxu0 0.0
    %1140 = vmatpush2.msra.mxu0 0.0
    %1141 = vmatprep.subr.mxu0 0.0
    %1142 = vmatpush2.msra.mxu0 0.0
    %1143 = vmatprep.subr.mxu0 0.0
    %1144 = vmatpush2.msra.mxu0 0.0
    %1145 = vmatprep.subr.mxu0 0.0
    %1146 = vmatpush2.msra.mxu0 0.0
    %1147 = vmatprep.subr.mxu0 0.0
    %1148 = vmatpush2.msra.mxu0 0.0
    %1149 = vmatprep.subr.mxu0 0.0
    %1150 = vmatpush2.msra.mxu0 0.0
    %1151 = vmatprep.mubr.f32.mxu0 0.0
    %1152 = vmatmul.mubr.f32.gmra.mxu0 %v1063
    %v1153 = vpop.f32.mrf.mxu0
    %v1154 = vadd.f32 0.0, %v1153
    %v1155 = vpop.f32.mrf.mxu0
    %1156 = vmatprep.mubr.f32.mxu0 0.0
    %1157 = vmatmul.mubr.f32.gmra.mxu0 %v1064
    %v1158 = vpop.f32.mrf.mxu0
    %v1159 = vadd.f32 0.0, %v1158
    %v1160 = vpop.f32.mrf.mxu0
    %1161 = vdwg.mxu0
    %v1162 = vsel %vm359, %v1154, 0.0
    %v1163 = vsel %vm359, %v1159, 0.0
    %v1164 = vadd.f32 %v1162, %v1163
    %v1165 = vrot.slane %v1164, 4
    %v1166 = vadd.f32 %v1164, %v1165
    %v1167 = vrot.slane %v1166, 2
    %v1168 = vadd.f32 %v1166, %v1167
    %v1169 = vrot.slane %v1168, 1
    %v1170 = vadd.f32 %v1168, %v1169
    %v1171 = vmul.f32 %v1063, %v1063
    %v1172 = vmul.f32 %v1064, %v1064
    %1173 = vmatprep.subr.mxu0 0.0
    %1174 = vmatpush1.msra.mxu0 %v1086
    %1175 = vmatprep.subr.mxu0 0.0
    %1176 = vmatpush1.msra.mxu0 %v1085
    %1177 = vmatprep.subr.mxu0 0.0
    %1178 = vmatpush1.msra.mxu0 %v1084
    %1179 = vmatprep.subr.mxu0 0.0
    %1180 = vmatpush1.msra.mxu0 %v1083
    %1181 = vmatprep.subr.mxu0 0.0
    %1182 = vmatpush1.msra.mxu0 %v1082
    %1183 = vmatprep.subr.mxu0 0.0
    %1184 = vmatpush1.msra.mxu0 %v1081
    %1185 = vmatprep.subr.mxu0 0.0
    %1186 = vmatpush1.msra.mxu0 %v1080
    %1187 = vmatprep.subr.mxu0 0.0
    %1188 = vmatpush1.msra.mxu0 %v1079
    %1189 = vmatprep.subr.mxu0 0.0
    %1190 = vmatpush1.msra.mxu0 %v1078
    %1191 = vmatprep.subr.mxu0 0.0
    %1192 = vmatpush1.msra.mxu0 %v1077
    %1193 = vmatprep.subr.mxu0 0.0
    %1194 = vmatpush1.msra.mxu0 %v1076
    %1195 = vmatprep.subr.mxu0 0.0
    %1196 = vmatpush1.msra.mxu0 %v1075
    %1197 = vmatprep.subr.mxu0 0.0
    %1198 = vmatpush1.msra.mxu0 %v1074
    %1199 = vmatprep.subr.mxu0 0.0
    %1200 = vmatpush1.msra.mxu0 %v1073
    %1201 = vmatprep.subr.mxu0 0.0
    %1202 = vmatpush1.msra.mxu0 %v1072
    %1203 = vmatprep.subr.mxu0 0.0
    %1204 = vmatpush1.msra.mxu0 %v1071
    %1205 = vmatprep.subr.mxu0 0.0
    %1206 = vmatpush2.msra.mxu0 0.0
    %1207 = vmatprep.subr.mxu0 0.0
    %1208 = vmatpush2.msra.mxu0 0.0
    %1209 = vmatprep.subr.mxu0 0.0
    %1210 = vmatpush2.msra.mxu0 0.0
    %1211 = vmatprep.subr.mxu0 0.0
    %1212 = vmatpush2.msra.mxu0 0.0
    %1213 = vmatprep.subr.mxu0 0.0
    %1214 = vmatpush2.msra.mxu0 0.0
    %1215 = vmatprep.subr.mxu0 0.0
    %1216 = vmatpush2.msra.mxu0 0.0
    %1217 = vmatprep.subr.mxu0 0.0
    %1218 = vmatpush2.msra.mxu0 0.0
    %1219 = vmatprep.subr.mxu0 0.0
    %1220 = vmatpush2.msra.mxu0 0.0
    %1221 = vmatprep.subr.mxu0 0.0
    %1222 = vmatpush2.msra.mxu0 0.0
    %1223 = vmatprep.subr.mxu0 0.0
    %1224 = vmatpush2.msra.mxu0 0.0
    %1225 = vmatprep.subr.mxu0 0.0
    %1226 = vmatpush2.msra.mxu0 0.0
    %1227 = vmatprep.subr.mxu0 0.0
    %1228 = vmatpush2.msra.mxu0 0.0
    %1229 = vmatprep.subr.mxu0 0.0
    %1230 = vmatpush2.msra.mxu0 0.0
    %1231 = vmatprep.subr.mxu0 0.0
    %1232 = vmatpush2.msra.mxu0 0.0
    %1233 = vmatprep.subr.mxu0 0.0
    %1234 = vmatpush2.msra.mxu0 0.0
    %1235 = vmatprep.subr.mxu0 0.0
    %1236 = vmatpush2.msra.mxu0 0.0
    %1237 = vmatprep.mubr.f32.mxu0 0.0
    %1238 = vmatmul.mubr.f32.gmra.mxu0 %v1171
    %v1239 = vpop.f32.mrf.mxu0
    %v1240 = vadd.f32 0.0, %v1239
    %v1241 = vpop.f32.mrf.mxu0
    %1242 = vmatprep.mubr.f32.mxu0 0.0
    %1243 = vmatmul.mubr.f32.gmra.mxu0 %v1172
    %v1244 = vpop.f32.mrf.mxu0
    %v1245 = vadd.f32 0.0, %v1244
    %v1246 = vpop.f32.mrf.mxu0
    %1247 = vdwg.mxu0
    %v1248 = vsel %vm359, %v1240, 0.0
    %v1249 = vsel %vm359, %v1245, 0.0
    %v1250 = vadd.f32 %v1248, %v1249
    %v1251 = vrot.slane %v1250, 4
    %v1252 = vadd.f32 %v1250, %v1251
    %v1253 = vrot.slane %v1252, 2
    %v1254 = vadd.f32 %v1252, %v1253
    %v1255 = vrot.slane %v1254, 1
    %v1256 = vadd.f32 %v1254, %v1255
    %v1257 = vmul.f32 %v1170, 0.0078125
    %v1258 = vmul.f32 %v1256, 0.0078125
    %v1259 = vmul.f32 %v1257, %v1257
    %v1260 = vsub.f32 %v1258, %v1259
    %v1261 = vld [vmem:[%s9] sm:$0x1]
    %v1262 = vadd.f32 %v1260, 1e-05
    %v1263 = vrsqrt.pop %v1262
    %v1264 = vmul.f32 %v1261, %v1263
    %v1265 = vld [vmem:[%s10] sm:$0x1]
    %v1266 = vmul.f32 %v1257, %v1264
    %v1267 = vsub.f32 %v1265, %v1266
    %v1269 = vlaneseq
    %v1270 = vshrl.u32 %v1269, 7
    %v1271 = vsub.s32 0, %v1270
    %v1272 = vrot.slane %v1264, %v1271
    %1273 = vrot.lane.b32.xlu0 %v1272, 16
    %v1274 = vpop.permute.xlu0 %1273
    %1276 = vrot.lane.b32.xlu0 %v1272, 32
    %v1277 = vpop.permute.xlu0 %1276
    %1279 = vrot.lane.b32.xlu0 %v1272, 48
    %v1280 = vpop.permute.xlu0 %1279
    %1282 = vrot.lane.b32.xlu0 %v1272, 64
    %v1283 = vpop.permute.xlu0 %1282
    %1285 = vrot.lane.b32.xlu0 %v1272, 80
    %v1286 = vpop.permute.xlu0 %1285
    %1288 = vrot.lane.b32.xlu0 %v1272, 96
    %v1289 = vpop.permute.xlu0 %1288
    %1291 = vrot.lane.b32.xlu0 %v1272, 112
    %v1292 = vpop.permute.xlu0 %1291
    %v1294 = vsel %vm359, %v1264, %v1274
    %v1295 = vsel %vm367, %v1294, %v1277
    %v1296 = vsel %vm375, %v1295, %v1280
    %v1297 = vsel %vm67, %v1296, %v1283
    %vm1298 = vcmask 654336
    %v1299 = vsel %vm1298, %v1297, %v1286
    %vm1300 = vcmask 785408
    %v1301 = vsel %vm1300, %v1299, %v1289
    %vm1302 = vcmask 916480
    %v1303 = vsel %vm1302, %v1301, %v1292
    %v1305 = vlaneseq
    %v1306 = vshrl.u32 %v1305, 7
    %v1307 = vsub.s32 0, %v1306
    %v1308 = vrot.slane %v1267, %v1307
    %1309 = vrot.lane.b32.xlu0 %v1308, 16
    %v1310 = vpop.permute.xlu0 %1309
    %1312 = vrot.lane.b32.xlu0 %v1308, 32
    %v1313 = vpop.permute.xlu0 %1312
    %1315 = vrot.lane.b32.xlu0 %v1308, 48
    %v1316 = vpop.permute.xlu0 %1315
    %1318 = vrot.lane.b32.xlu0 %v1308, 64
    %v1319 = vpop.permute.xlu0 %1318
    %1321 = vrot.lane.b32.xlu0 %v1308, 80
    %v1322 = vpop.permute.xlu0 %1321
    %1324 = vrot.lane.b32.xlu0 %v1308, 96
    %v1325 = vpop.permute.xlu0 %1324
    %1327 = vrot.lane.b32.xlu0 %v1308, 112
    %v1328 = vpop.permute.xlu0 %1327
    %v1330 = vsel %vm359, %v1267, %v1310
    %v1331 = vsel %vm367, %v1330, %v1313
    %v1332 = vsel %vm375, %v1331, %v1316
    %v1333 = vsel %vm67, %v1332, %v1319
    %v1334 = vsel %vm1298, %v1333, %v1322
    %v1335 = vsel %vm1300, %v1334, %v1325
    %v1336 = vsel %vm1302, %v1335, %v1328
    %v1337 = vlaneseq
    %v1338 = vshrl.u32 %v1337, 7
    %v1339 = vsub.s32 0, %v1338
    %v1340 = vrot.slane %v1303, %v1339
    %v1341 = vmul.f32 %v1063, %v1340
    %v1342 = vmul.f32 %v1064, %v1340
    %v1343 = vlaneseq
    %v1344 = vshrl.u32 %v1343, 7
    %v1345 = vsub.s32 0, %v1344
    %v1346 = vrot.slane %v1336, %v1345
    %v1347 = vadd.f32 %v1341, %v1346
    %v1348 = vadd.f32 %v1342, %v1346
    %v1349 = vmax.f32 %v1347, 0.0
    %v1350 = vmax.f32 %v1348, 0.0
    %v1351 = vld [vmem:[#allocation2] sm:$0xff]
    %v1352 = vld [vmem:[#allocation2 + $0x8] sm:$0xff]
    %v1353 = vld [vmem:[#allocation2 + $0x10] sm:$0xff]
    %v1354 = vld [vmem:[#allocation2 + $0x18] sm:$0xff]
    %v1355 = vld [vmem:[#allocation2 + $0x20] sm:$0xff]
    %v1356 = vld [vmem:[#allocation2 + $0x28] sm:$0xff]
    %v1357 = vld [vmem:[#allocation2 + $0x30] sm:$0xff]
    %v1358 = vld [vmem:[#allocation2 + $0x38] sm:$0xff]
    %v1359 = vld [vmem:[#allocation2 + $0x40] sm:$0xff]
    %v1360 = vld [vmem:[#allocation2 + $0x48] sm:$0xff]
    %v1361 = vld [vmem:[#allocation2 + $0x50] sm:$0xff]
    %v1362 = vld [vmem:[#allocation2 + $0x58] sm:$0xff]
    %v1363 = vld [vmem:[#allocation2 + $0x60] sm:$0xff]
    %v1364 = vld [vmem:[#allocation2 + $0x68] sm:$0xff]
    %v1365 = vld [vmem:[#allocation2 + $0x70] sm:$0xff]
    %v1366 = vld [vmem:[#allocation2 + $0x78] sm:$0xff]
    %1367 = vmatprep.subr.mxu0 0.0
    %1368 = vmatpush1.msra.mxu0 %v1366
    %1369 = vmatprep.subr.mxu0 0.0
    %1370 = vmatpush1.msra.mxu0 %v1365
    %1371 = vmatprep.subr.mxu0 0.0
    %1372 = vmatpush1.msra.mxu0 %v1364
    %1373 = vmatprep.subr.mxu0 0.0
    %1374 = vmatpush1.msra.mxu0 %v1363
    %1375 = vmatprep.subr.mxu0 0.0
    %1376 = vmatpush1.msra.mxu0 %v1362
    %1377 = vmatprep.subr.mxu0 0.0
    %1378 = vmatpush1.msra.mxu0 %v1361
    %1379 = vmatprep.subr.mxu0 0.0
    %1380 = vmatpush1.msra.mxu0 %v1360
    %1381 = vmatprep.subr.mxu0 0.0
    %1382 = vmatpush1.msra.mxu0 %v1359
    %1383 = vmatprep.subr.mxu0 0.0
    %1384 = vmatpush1.msra.mxu0 %v1358
    %1385 = vmatprep.subr.mxu0 0.0
    %1386 = vmatpush1.msra.mxu0 %v1357
    %1387 = vmatprep.subr.mxu0 0.0
    %1388 = vmatpush1.msra.mxu0 %v1356
    %1389 = vmatprep.subr.mxu0 0.0
    %1390 = vmatpush1.msra.mxu0 %v1355
    %1391 = vmatprep.subr.mxu0 0.0
    %1392 = vmatpush1.msra.mxu0 %v1354
    %1393 = vmatprep.subr.mxu0 0.0
    %1394 = vmatpush1.msra.mxu0 %v1353
    %1395 = vmatprep.subr.mxu0 0.0
    %1396 = vmatpush1.msra.mxu0 %v1352
    %1397 = vmatprep.subr.mxu0 0.0
    %1398 = vmatpush1.msra.mxu0 %v1351
    %1399 = vmatprep.subr.mxu0 0.0
    %1400 = vmatpush2.msra.mxu0 0.0
    %1401 = vmatprep.subr.mxu0 0.0
    %1402 = vmatpush2.msra.mxu0 0.0
    %1403 = vmatprep.subr.mxu0 0.0
    %1404 = vmatpush2.msra.mxu0 0.0
    %1405 = vmatprep.subr.mxu0 0.0
    %1406 = vmatpush2.msra.mxu0 0.0
    %1407 = vmatprep.subr.mxu0 0.0
    %1408 = vmatpush2.msra.mxu0 0.0
    %1409 = vmatprep.subr.mxu0 0.0
    %1410 = vmatpush2.msra.mxu0 0.0
    %1411 = vmatprep.subr.mxu0 0.0
    %1412 = vmatpush2.msra.mxu0 0.0
    %1413 = vmatprep.subr.mxu0 0.0
    %1414 = vmatpush2.msra.mxu0 0.0
    %1415 = vmatprep.subr.mxu0 0.0
    %1416 = vmatpush2.msra.mxu0 0.0
    %1417 = vmatprep.subr.mxu0 0.0
    %1418 = vmatpush2.msra.mxu0 0.0
    %1419 = vmatprep.subr.mxu0 0.0
    %1420 = vmatpush2.msra.mxu0 0.0
    %1421 = vmatprep.subr.mxu0 0.0
    %1422 = vmatpush2.msra.mxu0 0.0
    %1423 = vmatprep.subr.mxu0 0.0
    %1424 = vmatpush2.msra.mxu0 0.0
    %1425 = vmatprep.subr.mxu0 0.0
    %1426 = vmatpush2.msra.mxu0 0.0
    %1427 = vmatprep.subr.mxu0 0.0
    %1428 = vmatpush2.msra.mxu0 0.0
    %1429 = vmatprep.subr.mxu0 0.0
    %1430 = vmatpush2.msra.mxu0 0.0
    %1431 = vmatprep.mubr.f32.mxu0 0.0
    %1432 = vmatmul.mubr.f32.gmra.mxu0 %v1349
    %v1433 = vpop.f32.mrf.mxu0
    %v1434 = vadd.f32 0.0, %v1433
    %v1435 = vpop.f32.mrf.mxu0
    %1436 = vmatprep.mubr.f32.mxu0 0.0
    %1437 = vmatmul.mubr.f32.gmra.mxu0 %v1350
    %v1438 = vpop.f32.mrf.mxu0
    %v1439 = vadd.f32 0.0, %v1438
    %v1440 = vpop.f32.mrf.mxu0
    %1441 = vdwg.mxu0
    %v1442 = vld [vmem:[%s4] sm:$0xff]
    %v1443 = vld [vmem:[%s4 + $0x8] sm:$0xff]
    %s1444 = scalar_lea.vmem [#allocation2], 128
    %v1445 = vld [vmem:[%s1444] sm:$0xff]
    %v1446 = vld [vmem:[%s1444 + $0x8] sm:$0xff]
    %v1447 = vld [vmem:[%s1444 + $0x10] sm:$0xff]
    %v1448 = vld [vmem:[%s1444 + $0x18] sm:$0xff]
    %v1449 = vld [vmem:[%s1444 + $0x20] sm:$0xff]
    %v1450 = vld [vmem:[%s1444 + $0x28] sm:$0xff]
    %v1451 = vld [vmem:[%s1444 + $0x30] sm:$0xff]
    %v1452 = vld [vmem:[%s1444 + $0x38] sm:$0xff]
    %v1453 = vld [vmem:[%s1444 + $0x40] sm:$0xff]
    %v1454 = vld [vmem:[%s1444 + $0x48] sm:$0xff]
    %v1455 = vld [vmem:[%s1444 + $0x50] sm:$0xff]
    %v1456 = vld [vmem:[%s1444 + $0x58] sm:$0xff]
    %v1457 = vld [vmem:[%s1444 + $0x60] sm:$0xff]
    %v1458 = vld [vmem:[%s1444 + $0x68] sm:$0xff]
    %v1459 = vld [vmem:[%s1444 + $0x70] sm:$0xff]
    %v1460 = vld [vmem:[%s1444 + $0x78] sm:$0xff]
    %1461 = vmatprep.subr.mxu0 0.0
    %1462 = vmatpush1.msra.mxu0 %v1460
    %1463 = vmatprep.subr.mxu0 0.0
    %1464 = vmatpush1.msra.mxu0 %v1459
    %1465 = vmatprep.subr.mxu0 0.0
    %1466 = vmatpush1.msra.mxu0 %v1458
    %1467 = vmatprep.subr.mxu0 0.0
    %1468 = vmatpush1.msra.mxu0 %v1457
    %1469 = vmatprep.subr.mxu0 0.0
    %1470 = vmatpush1.msra.mxu0 %v1456
    %1471 = vmatprep.subr.mxu0 0.0
    %1472 = vmatpush1.msra.mxu0 %v1455
    %1473 = vmatprep.subr.mxu0 0.0
    %1474 = vmatpush1.msra.mxu0 %v1454
    %1475 = vmatprep.subr.mxu0 0.0
    %1476 = vmatpush1.msra.mxu0 %v1453
    %1477 = vmatprep.subr.mxu0 0.0
    %1478 = vmatpush1.msra.mxu0 %v1452
    %1479 = vmatprep.subr.mxu0 0.0
    %1480 = vmatpush1.msra.mxu0 %v1451
    %1481 = vmatprep.subr.mxu0 0.0
    %1482 = vmatpush1.msra.mxu0 %v1450
    %1483 = vmatprep.subr.mxu0 0.0
    %1484 = vmatpush1.msra.mxu0 %v1449
    %1485 = vmatprep.subr.mxu0 0.0
    %1486 = vmatpush1.msra.mxu0 %v1448
    %1487 = vmatprep.subr.mxu0 0.0
    %1488 = vmatpush1.msra.mxu0 %v1447
    %1489 = vmatprep.subr.mxu0 0.0
    %1490 = vmatpush1.msra.mxu0 %v1446
    %1491 = vmatprep.subr.mxu0 0.0
    %1492 = vmatpush1.msra.mxu0 %v1445
    %1493 = vmatprep.subr.mxu0 0.0
    %1494 = vmatpush2.msra.mxu0 0.0
    %1495 = vmatprep.subr.mxu0 0.0
    %1496 = vmatpush2.msra.mxu0 0.0
    %1497 = vmatprep.subr.mxu0 0.0
    %1498 = vmatpush2.msra.mxu0 0.0
    %1499 = vmatprep.subr.mxu0 0.0
    %1500 = vmatpush2.msra.mxu0 0.0
    %1501 = vmatprep.subr.mxu0 0.0
    %1502 = vmatpush2.msra.mxu0 0.0
    %1503 = vmatprep.subr.mxu0 0.0
    %1504 = vmatpush2.msra.mxu0 0.0
    %1505 = vmatprep.subr.mxu0 0.0
    %1506 = vmatpush2.msra.mxu0 0.0
    %1507 = vmatprep.subr.mxu0 0.0
    %1508 = vmatpush2.msra.mxu0 0.0
    %1509 = vmatprep.subr.mxu0 0.0
    %1510 = vmatpush2.msra.mxu0 0.0
    %1511 = vmatprep.subr.mxu0 0.0
    %1512 = vmatpush2.msra.mxu0 0.0
    %1513 = vmatprep.subr.mxu0 0.0
    %1514 = vmatpush2.msra.mxu0 0.0
    %1515 = vmatprep.subr.mxu0 0.0
    %1516 = vmatpush2.msra.mxu0 0.0
    %1517 = vmatprep.subr.mxu0 0.0
    %1518 = vmatpush2.msra.mxu0 0.0
    %1519 = vmatprep.subr.mxu0 0.0
    %1520 = vmatpush2.msra.mxu0 0.0
    %1521 = vmatprep.subr.mxu0 0.0
    %1522 = vmatpush2.msra.mxu0 0.0
    %1523 = vmatprep.subr.mxu0 0.0
    %1524 = vmatpush2.msra.mxu0 0.0
    %1525 = vmatprep.mubr.f32.mxu0 0.0
    %1526 = vmatmul.mubr.f32.gmra.mxu0 %v1349
    %v1527 = vpop.f32.mrf.mxu0
    %v1528 = vadd.f32 0.0, %v1527
    %v1529 = vpop.f32.mrf.mxu0
    %1530 = vmatprep.mubr.f32.mxu0 0.0
    %1531 = vmatmul.mubr.f32.gmra.mxu0 %v1350
    %v1532 = vpop.f32.mrf.mxu0
    %v1533 = vadd.f32 0.0, %v1532
    %v1534 = vpop.f32.mrf.mxu0
    %1535 = vdwg.mxu0
    %s1536 = scalar_lea.vmem %s4, 16
    %v1537 = vld [vmem:[%s1536] sm:$0xff]
    %v1538 = vld [vmem:[%s1536 + $0x8] sm:$0xff]
    %v1540 = vsel %vm359, %v1537, 0
    %v1543 = vsel %vm359, %v1538, 0
    %1545 = vmatprep.subr.mxu0 0.0
    %1546 = vmatpush1.msra.mxu0 0.0
    %1547 = vmatprep.subr.mxu0 0.0
    %1548 = vmatpush1.msra.mxu0 0.0
    %1549 = vmatprep.subr.mxu0 0.0
    %1550 = vmatpush1.msra.mxu0 0.0
    %1551 = vmatprep.subr.mxu0 0.0
    %1552 = vmatpush1.msra.mxu0 0.0
    %1553 = vmatprep.subr.mxu0 0.0
    %1554 = vmatpush1.msra.mxu0 0.0
    %1555 = vmatprep.subr.mxu0 0.0
    %1556 = vmatpush1.msra.mxu0 0.0
    %1557 = vmatprep.subr.mxu0 0.0
    %1558 = vmatpush1.msra.mxu0 0.0
    %1559 = vmatprep.subr.mxu0 0.0
    %1560 = vmatpush1.msra.mxu0 0.0
    %1561 = vmatprep.subr.mxu0 0.0
    %1562 = vmatpush1.msra.mxu0 0.0
    %1563 = vmatprep.subr.mxu0 0.0
    %1564 = vmatpush1.msra.mxu0 0.0
    %1565 = vmatprep.subr.mxu0 0.0
    %1566 = vmatpush1.msra.mxu0 0.0
    %1567 = vmatprep.subr.mxu0 0.0
    %1568 = vmatpush1.msra.mxu0 0.0
    %1569 = vmatprep.subr.mxu0 0.0
    %1570 = vmatpush1.msra.mxu0 0.0
    %1571 = vmatprep.subr.mxu0 0.0
    %1572 = vmatpush1.msra.mxu0 0.0
    %1573 = vmatprep.subr.mxu0 0.0
    %1574 = vmatpush1.msra.mxu0 %v1533
    %1575 = vmatprep.subr.mxu0 0.0
    %1576 = vmatpush1.msra.mxu0 %v1528
    %1577 = vmatprep.subr.mxu0 0.0
    %1578 = vmatpush2.msra.mxu0 0.0
    %1579 = vmatprep.subr.mxu0 0.0
    %1580 = vmatpush2.msra.mxu0 0.0
    %1581 = vmatprep.subr.mxu0 0.0
    %1582 = vmatpush2.msra.mxu0 0.0
    %1583 = vmatprep.subr.mxu0 0.0
    %1584 = vmatpush2.msra.mxu0 0.0
    %1585 = vmatprep.subr.mxu0 0.0
    %1586 = vmatpush2.msra.mxu0 0.0
    %1587 = vmatprep.subr.mxu0 0.0
    %1588 = vmatpush2.msra.mxu0 0.0
    %1589 = vmatprep.subr.mxu0 0.0
    %1590 = vmatpush2.msra.mxu0 0.0
    %1591 = vmatprep.subr.mxu0 0.0
    %1592 = vmatpush2.msra.mxu0 0.0
    %1593 = vmatprep.subr.mxu0 0.0
    %1594 = vmatpush2.msra.mxu0 0.0
    %1595 = vmatprep.subr.mxu0 0.0
    %1596 = vmatpush2.msra.mxu0 0.0
    %1597 = vmatprep.subr.mxu0 0.0
    %1598 = vmatpush2.msra.mxu0 0.0
    %1599 = vmatprep.subr.mxu0 0.0
    %1600 = vmatpush2.msra.mxu0 0.0
    %1601 = vmatprep.subr.mxu0 0.0
    %1602 = vmatpush2.msra.mxu0 0.0
    %1603 = vmatprep.subr.mxu0 0.0
    %1604 = vmatpush2.msra.mxu0 0.0
    %1605 = vmatprep.subr.mxu0 0.0
    %1606 = vmatpush2.msra.mxu0 0.0
    %1607 = vmatprep.subr.mxu0 0.0
    %1608 = vmatpush2.msra.mxu0 0.0
    %1609 = vmatprep.mubr.f32.mxu0 0.0
    %1610 = vmatmul.mubr.f32.gmra.mxu0 %v1540
    %v1611 = vpop.f32.mrf.mxu0
    %v1612 = vadd.f32 0.0, %v1611
    %v1613 = vpop.f32.mrf.mxu0
    %1614 = vmatprep.mubr.f32.mxu0 0.0
    %1615 = vmatmul.mubr.f32.gmra.mxu0 %v1543
    %v1616 = vpop.f32.mrf.mxu0
    %v1617 = vadd.f32 0.0, %v1616
    %v1618 = vpop.f32.mrf.mxu0
    %1619 = vdwg.mxu0
    %v1621 = vsel %vm359, %v1442, 0
    %v1624 = vsel %vm359, %v1443, 0
    %1626 = vmatprep.subr.mxu0 0.0
    %1627 = vmatpush1.msra.mxu0 0.0
    %1628 = vmatprep.subr.mxu0 0.0
    %1629 = vmatpush1.msra.mxu0 0.0
    %1630 = vmatprep.subr.mxu0 0.0
    %1631 = vmatpush1.msra.mxu0 0.0
    %1632 = vmatprep.subr.mxu0 0.0
    %1633 = vmatpush1.msra.mxu0 0.0
    %1634 = vmatprep.subr.mxu0 0.0
    %1635 = vmatpush1.msra.mxu0 0.0
    %1636 = vmatprep.subr.mxu0 0.0
    %1637 = vmatpush1.msra.mxu0 0.0
    %1638 = vmatprep.subr.mxu0 0.0
    %1639 = vmatpush1.msra.mxu0 0.0
    %1640 = vmatprep.subr.mxu0 0.0
    %1641 = vmatpush1.msra.mxu0 0.0
    %1642 = vmatprep.subr.mxu0 0.0
    %1643 = vmatpush1.msra.mxu0 0.0
    %1644 = vmatprep.subr.mxu0 0.0
    %1645 = vmatpush1.msra.mxu0 0.0
    %1646 = vmatprep.subr.mxu0 0.0
    %1647 = vmatpush1.msra.mxu0 0.0
    %1648 = vmatprep.subr.mxu0 0.0
    %1649 = vmatpush1.msra.mxu0 0.0
    %1650 = vmatprep.subr.mxu0 0.0
    %1651 = vmatpush1.msra.mxu0 0.0
    %1652 = vmatprep.subr.mxu0 0.0
    %1653 = vmatpush1.msra.mxu0 0.0
    %1654 = vmatprep.subr.mxu0 0.0
    %1655 = vmatpush1.msra.mxu0 %v1439
    %1656 = vmatprep.subr.mxu0 0.0
    %1657 = vmatpush1.msra.mxu0 %v1434
    %1658 = vmatprep.subr.mxu0 0.0
    %1659 = vmatpush2.msra.mxu0 0.0
    %1660 = vmatprep.subr.mxu0 0.0
    %1661 = vmatpush2.msra.mxu0 0.0
    %1662 = vmatprep.subr.mxu0 0.0
    %1663 = vmatpush2.msra.mxu0 0.0
    %1664 = vmatprep.subr.mxu0 0.0
    %1665 = vmatpush2.msra.mxu0 0.0
    %1666 = vmatprep.subr.mxu0 0.0
    %1667 = vmatpush2.msra.mxu0 0.0
    %1668 = vmatprep.subr.mxu0 0.0
    %1669 = vmatpush2.msra.mxu0 0.0
    %1670 = vmatprep.subr.mxu0 0.0
    %1671 = vmatpush2.msra.mxu0 0.0
    %1672 = vmatprep.subr.mxu0 0.0
    %1673 = vmatpush2.msra.mxu0 0.0
    %1674 = vmatprep.subr.mxu0 0.0
    %1675 = vmatpush2.msra.mxu0 0.0
    %1676 = vmatprep.subr.mxu0 0.0
    %1677 = vmatpush2.msra.mxu0 0.0
    %1678 = vmatprep.subr.mxu0 0.0
    %1679 = vmatpush2.msra.mxu0 0.0
    %1680 = vmatprep.subr.mxu0 0.0
    %1681 = vmatpush2.msra.mxu0 0.0
    %1682 = vmatprep.subr.mxu0 0.0
    %1683 = vmatpush2.msra.mxu0 0.0
    %1684 = vmatprep.subr.mxu0 0.0
    %1685 = vmatpush2.msra.mxu0 0.0
    %1686 = vmatprep.subr.mxu0 0.0
    %1687 = vmatpush2.msra.mxu0 0.0
    %1688 = vmatprep.subr.mxu0 0.0
    %1689 = vmatpush2.msra.mxu0 0.0
    %1690 = vmatprep.mubr.f32.mxu0 0.0
    %1691 = vmatmul.mubr.f32.gmra.mxu0 %v1621
    %v1692 = vpop.f32.mrf.mxu0
    %v1693 = vadd.f32 %v1612, %v1692
    %v1694 = vpop.f32.mrf.mxu0
    %1695 = vmatprep.mubr.f32.mxu0 0.0
    %1696 = vmatmul.mubr.f32.gmra.mxu0 %v1624
    %v1697 = vpop.f32.mrf.mxu0
    %v1698 = vadd.f32 %v1617, %v1697
    %v1699 = vpop.f32.mrf.mxu0
    %1700 = vdwg.mxu0
    %s1701 = scalar_lea.vmem [#allocation2], 256
    %v1702 = vld [vmem:[%s1701] sm:$0xff]
    %v1703 = vld [vmem:[%s1701 + $0x8] sm:$0xff]
    %v1704 = vld [vmem:[%s1701 + $0x10] sm:$0xff]
    %v1705 = vld [vmem:[%s1701 + $0x18] sm:$0xff]
    %v1706 = vld [vmem:[%s1701 + $0x20] sm:$0xff]
    %v1707 = vld [vmem:[%s1701 + $0x28] sm:$0xff]
    %v1708 = vld [vmem:[%s1701 + $0x30] sm:$0xff]
    %v1709 = vld [vmem:[%s1701 + $0x38] sm:$0xff]
    %v1710 = vld [vmem:[%s1701 + $0x40] sm:$0xff]
    %v1711 = vld [vmem:[%s1701 + $0x48] sm:$0xff]
    %v1712 = vld [vmem:[%s1701 + $0x50] sm:$0xff]
    %v1713 = vld [vmem:[%s1701 + $0x58] sm:$0xff]
    %v1714 = vld [vmem:[%s1701 + $0x60] sm:$0xff]
    %v1715 = vld [vmem:[%s1701 + $0x68] sm:$0xff]
    %v1716 = vld [vmem:[%s1701 + $0x70] sm:$0xff]
    %v1717 = vld [vmem:[%s1701 + $0x78] sm:$0xff]
    %1718 = vmatprep.subr.mxu0 0.0
    %1719 = vmatpush1.msra.mxu0 %v1717
    %1720 = vmatprep.subr.mxu0 0.0
    %1721 = vmatpush1.msra.mxu0 %v1716
    %1722 = vmatprep.subr.mxu0 0.0
    %1723 = vmatpush1.msra.mxu0 %v1715
    %1724 = vmatprep.subr.mxu0 0.0
    %1725 = vmatpush1.msra.mxu0 %v1714
    %1726 = vmatprep.subr.mxu0 0.0
    %1727 = vmatpush1.msra.mxu0 %v1713
    %1728 = vmatprep.subr.mxu0 0.0
    %1729 = vmatpush1.msra.mxu0 %v1712
    %1730 = vmatprep.subr.mxu0 0.0
    %1731 = vmatpush1.msra.mxu0 %v1711
    %1732 = vmatprep.subr.mxu0 0.0
    %1733 = vmatpush1.msra.mxu0 %v1710
    %1734 = vmatprep.subr.mxu0 0.0
    %1735 = vmatpush1.msra.mxu0 %v1709
    %1736 = vmatprep.subr.mxu0 0.0
    %1737 = vmatpush1.msra.mxu0 %v1708
    %1738 = vmatprep.subr.mxu0 0.0
    %1739 = vmatpush1.msra.mxu0 %v1707
    %1740 = vmatprep.subr.mxu0 0.0
    %1741 = vmatpush1.msra.mxu0 %v1706
    %1742 = vmatprep.subr.mxu0 0.0
    %1743 = vmatpush1.msra.mxu0 %v1705
    %1744 = vmatprep.subr.mxu0 0.0
    %1745 = vmatpush1.msra.mxu0 %v1704
    %1746 = vmatprep.subr.mxu0 0.0
    %1747 = vmatpush1.msra.mxu0 %v1703
    %1748 = vmatprep.subr.mxu0 0.0
    %1749 = vmatpush1.msra.mxu0 %v1702
    %1750 = vmatprep.subr.mxu0 0.0
    %1751 = vmatpush2.msra.mxu0 0.0
    %1752 = vmatprep.subr.mxu0 0.0
    %1753 = vmatpush2.msra.mxu0 0.0
    %1754 = vmatprep.subr.mxu0 0.0
    %1755 = vmatpush2.msra.mxu0 0.0
    %1756 = vmatprep.subr.mxu0 0.0
    %1757 = vmatpush2.msra.mxu0 0.0
    %1758 = vmatprep.subr.mxu0 0.0
    %1759 = vmatpush2.msra.mxu0 0.0
    %1760 = vmatprep.subr.mxu0 0.0
    %1761 = vmatpush2.msra.mxu0 0.0
    %1762 = vmatprep.subr.mxu0 0.0
    %1763 = vmatpush2.msra.mxu0 0.0
    %1764 = vmatprep.subr.mxu0 0.0
    %1765 = vmatpush2.msra.mxu0 0.0
    %1766 = vmatprep.subr.mxu0 0.0
    %1767 = vmatpush2.msra.mxu0 0.0
    %1768 = vmatprep.subr.mxu0 0.0
    %1769 = vmatpush2.msra.mxu0 0.0
    %1770 = vmatprep.subr.mxu0 0.0
    %1771 = vmatpush2.msra.mxu0 0.0
    %1772 = vmatprep.subr.mxu0 0.0
    %1773 = vmatpush2.msra.mxu0 0.0
    %1774 = vmatprep.subr.mxu0 0.0
    %1775 = vmatpush2.msra.mxu0 0.0
    %1776 = vmatprep.subr.mxu0 0.0
    %1777 = vmatpush2.msra.mxu0 0.0
    %1778 = vmatprep.subr.mxu0 0.0
    %1779 = vmatpush2.msra.mxu0 0.0
    %1780 = vmatprep.subr.mxu0 0.0
    %1781 = vmatpush2.msra.mxu0 0.0
    %1782 = vmatprep.mubr.f32.mxu0 0.0
    %1783 = vmatmul.mubr.f32.gmra.mxu0 %v1349
    %v1784 = vpop.f32.mrf.mxu0
    %v1785 = vadd.f32 0.0, %v1784
    %v1786 = vpop.f32.mrf.mxu0
    %1787 = vmatprep.mubr.f32.mxu0 0.0
    %1788 = vmatmul.mubr.f32.gmra.mxu0 %v1350
    %v1789 = vpop.f32.mrf.mxu0
    %v1790 = vadd.f32 0.0, %v1789
    %v1791 = vpop.f32.mrf.mxu0
    %1792 = vdwg.mxu0
    %s1793 = scalar_lea.vmem %s4, 32
    %v1794 = vld [vmem:[%s1793] sm:$0xff]
    %v1795 = vld [vmem:[%s1793 + $0x8] sm:$0xff]
    %v1797 = vsel %vm359, %v1794, 0
    %v1800 = vsel %vm359, %v1795, 0
    %1802 = vmatprep.subr.mxu0 0.0
    %1803 = vmatpush1.msra.mxu0 0.0
    %1804 = vmatprep.subr.mxu0 0.0
    %1805 = vmatpush1.msra.mxu0 0.0
    %1806 = vmatprep.subr.mxu0 0.0
    %1807 = vmatpush1.msra.mxu0 0.0
    %1808 = vmatprep.subr.mxu0 0.0
    %1809 = vmatpush1.msra.mxu0 0.0
    %1810 = vmatprep.subr.mxu0 0.0
    %1811 = vmatpush1.msra.mxu0 0.0
    %1812 = vmatprep.subr.mxu0 0.0
    %1813 = vmatpush1.msra.mxu0 0.0
    %1814 = vmatprep.subr.mxu0 0.0
    %1815 = vmatpush1.msra.mxu0 0.0
    %1816 = vmatprep.subr.mxu0 0.0
    %1817 = vmatpush1.msra.mxu0 0.0
    %1818 = vmatprep.subr.mxu0 0.0
    %1819 = vmatpush1.msra.mxu0 0.0
    %1820 = vmatprep.subr.mxu0 0.0
    %1821 = vmatpush1.msra.mxu0 0.0
    %1822 = vmatprep.subr.mxu0 0.0
    %1823 = vmatpush1.msra.mxu0 0.0
    %1824 = vmatprep.subr.mxu0 0.0
    %1825 = vmatpush1.msra.mxu0 0.0
    %1826 = vmatprep.subr.mxu0 0.0
    %1827 = vmatpush1.msra.mxu0 0.0
    %1828 = vmatprep.subr.mxu0 0.0
    %1829 = vmatpush1.msra.mxu0 0.0
    %1830 = vmatprep.subr.mxu0 0.0
    %1831 = vmatpush1.msra.mxu0 %v1790
    %1832 = vmatprep.subr.mxu0 0.0
    %1833 = vmatpush1.msra.mxu0 %v1785
    %1834 = vmatprep.subr.mxu0 0.0
    %1835 = vmatpush2.msra.mxu0 0.0
    %1836 = vmatprep.subr.mxu0 0.0
    %1837 = vmatpush2.msra.mxu0 0.0
    %1838 = vmatprep.subr.mxu0 0.0
    %1839 = vmatpush2.msra.mxu0 0.0
    %1840 = vmatprep.subr.mxu0 0.0
    %1841 = vmatpush2.msra.mxu0 0.0
    %1842 = vmatprep.subr.mxu0 0.0
    %1843 = vmatpush2.msra.mxu0 0.0
    %1844 = vmatprep.subr.mxu0 0.0
    %1845 = vmatpush2.msra.mxu0 0.0
    %1846 = vmatprep.subr.mxu0 0.0
    %1847 = vmatpush2.msra.mxu0 0.0
    %1848 = vmatprep.subr.mxu0 0.0
    %1849 = vmatpush2.msra.mxu0 0.0
    %1850 = vmatprep.subr.mxu0 0.0
    %1851 = vmatpush2.msra.mxu0 0.0
    %1852 = vmatprep.subr.mxu0 0.0
    %1853 = vmatpush2.msra.mxu0 0.0
    %1854 = vmatprep.subr.mxu0 0.0
    %1855 = vmatpush2.msra.mxu0 0.0
    %1856 = vmatprep.subr.mxu0 0.0
    %1857 = vmatpush2.msra.mxu0 0.0
    %1858 = vmatprep.subr.mxu0 0.0
    %1859 = vmatpush2.msra.mxu0 0.0
    %1860 = vmatprep.subr.mxu0 0.0
    %1861 = vmatpush2.msra.mxu0 0.0
    %1862 = vmatprep.subr.mxu0 0.0
    %1863 = vmatpush2.msra.mxu0 0.0
    %1864 = vmatprep.subr.mxu0 0.0
    %1865 = vmatpush2.msra.mxu0 0.0
    %1866 = vmatprep.mubr.f32.mxu0 0.0
    %1867 = vmatmul.mubr.f32.gmra.mxu0 %v1797
    %v1868 = vpop.f32.mrf.mxu0
    %v1869 = vadd.f32 0.0, %v1868
    %v1870 = vpop.f32.mrf.mxu0
    %1871 = vmatprep.mubr.f32.mxu0 0.0
    %1872 = vmatmul.mubr.f32.gmra.mxu0 %v1800
    %v1873 = vpop.f32.mrf.mxu0
    %v1874 = vadd.f32 0.0, %v1873
    %v1875 = vpop.f32.mrf.mxu0
    %1876 = vdwg.mxu0
    %v1877 = vadd.f32 %v1693, %v1869
    %v1878 = vadd.f32 %v1698, %v1874
    %v1879 = vlaneseq
    %v1880 = vshrl.u32 %v1879, 7
    %v1881 = vsub.s32 2, %v1880
    %v1882 = vrot.slane %v468, %v1881
    %v1883 = vadd.f32 %v1877, %v1882
    %v1884 = vadd.f32 %v1878, %v1882
    %v1885 = vadd.f32 %v1883, %v1069
    %v1886 = vadd.f32 %v1884, %v1070
    %1887 = vst [vmem:[%s12] sm:$0xff] %v1885
    %1888 = vst [vmem:[%s12 + $0x8] sm:$0xff] %v1886
    // Predicated region
    $region54: #{stacked_preresnet_block.1} parent=1 // pred_check
      _
    $region55: #{stacked_preresnet_block.1} parent=1 // pred_check_branch
      %1890 = sbr.rel (0) target = $region57
    $region56: #{stacked_preresnet_block.1} parent=1 // pred_region
      _
    $region57: #{stacked_preresnet_block.1} parent=1 // pred_fallthru
      _
    // Predicated region
    $region58: #{stacked_preresnet_block.1} parent=1 // pred_check
      _
    $region59: #{stacked_preresnet_block.1} parent=1 // pred_check_branch
      %1892 = sbr.rel (0) target = $region61
    $region60: #{stacked_preresnet_block.1} parent=1 // pred_region
      _
    $region61: #{stacked_preresnet_block.1} parent=1 // pred_fallthru
      _
    %1893 = vsyncpa [#allocation3], 1

</llo_original>
